<compile_context>
chip_gen: v5e
topology: v5e:2x2
jax: 0.10.0
libtpu: 0.0.40
codegen_flags: <defaults>
</compile_context>

<pallas_src>
import functools

import jax
import jax.numpy as jnp
from jax.experimental import pallas as pl
from jax.experimental.pallas import tpu as pltpu

EPS = 1e-5  # nn.BatchNorm2d default eps


def _round_up(x, m):
    return (x + m - 1) // m * m


# --------------------------------------------------------------------------
# in-kernel helpers
# --------------------------------------------------------------------------
def _build_patches(patches_ref, x, *, W, R):
    """Write 3x3/stride-1/pad-1 im2col patches of `x` into a VMEM scratch.

    x           : [Nb, Cin, R] float32, pixel index r = h*W + w (lane axis).
    patches_ref : [Kp, Nb*R] bfloat16 scratch; k = (kh*3+kw)*Cin + ci,
                  lane = n*R + r.  Kp = 9*Cin rounded up to a multiple of 16
                  (bf16 packed tile); padded rows are written as zeros and the
                  matching weight rows are zero, so they contribute nothing.

    Taps come from pltpu.roll (XLU) + iota boundary masks: no padded copy of
    x, no memset, no 9-way sublane concatenation.  Stores are grouped so each
    bf16 store starts on a packed (16,128) tile boundary (Cin % 8 == 0).
    """
    Nb, Cin, _ = x.shape
    Kp = patches_ref.shape[0]

    # boundary masks, computed once per kernel invocation
    lane = jax.lax.broadcasted_iota(jnp.int32, (1, R), 1)   # r = h*W + w
    wc = lane % W
    ok_w = {-1: wc >= 1, 1: wc <= W - 2}                     # w boundaries
    ok_h = {-1: lane >= W, 1: lane < R - W}                  # h boundaries

    offsets = [(kh - 1, kw - 1) for kh in range(3) for kw in range(3)]
    masks = []
    for dh, dw in offsets:
        m = None
        if dh != 0:
            m = ok_h[dh]
        if dw != 0:
            m = ok_w[dw] if m is None else jnp.logical_and(m, ok_w[dw])
        masks.append(m)

    # taps per store: with Cin % 16 == 0 each tap is tile aligned on its own;
    # with Cin % 16 == 8 (e.g. the C=8 test shape) pair taps per store.
    group = 1 if Cin % 16 == 0 else 2

    for n in range(Nb):
        xn = x[n]                                            # [Cin, R] f32
        taps = []
        for (dh, dw), m in zip(offsets, masks):
            delta = dh * W + dw                              # source pixel offset
            t = pltpu.roll(xn, (-delta) % R, axis=1) if delta else xn
            if m is not None:
                t = jnp.where(m, t, 0.0)
            taps.append(t)
        for g in range(0, 9, group):
            chunk = taps[g:g + group]
            rows = len(chunk) * Cin
            row0 = g * Cin
            pad = Kp - 9 * Cin if (row0 + rows == 9 * Cin) else 0
            if pad:
                chunk = chunk + [jnp.zeros((pad, R), jnp.float32)]
            blk = chunk[0] if len(chunk) == 1 else jnp.concatenate(chunk, axis=0)
            patches_ref[pl.ds(row0, rows + pad), pl.ds(n * R, R)] = (
                blk.astype(jnp.bfloat16))


def _partial_stats(y):
    """Per-channel (sum, sum_sq) over the lane (pixel) axis; y is f32."""
    s = jnp.sum(y, axis=1, keepdims=True)                    # [C, 1]
    sq = jnp.sum(y * y, axis=1, keepdims=True)               # [C, 1]
    return jnp.concatenate([s, sq], axis=1)                  # [C, 2]


# --------------------------------------------------------------------------
# kernels (grid over image groups; one [Nb, C, H*W] slab per grid step)
# --------------------------------------------------------------------------
def _conv1_kernel(x_ref, w_ref, y_ref, stats_ref, patches_ref, *, W, R):
    _build_patches(patches_ref, x_ref[...], W=W, R=R)        # f32 -> bf16 taps
    y = jnp.dot(w_ref[...], patches_ref[...],
                preferred_element_type=jnp.float32)          # [Cout, Nb*R] f32

    @pl.when(pl.program_id(0) == 0)
    def _():
        stats_ref[...] = jnp.zeros_like(stats_ref)
    stats_ref[...] += _partial_stats(y)                      # stats from f32 acc

    yb = y.astype(jnp.bfloat16)                              # bf16 inter-pass slab
    for n in range(y_ref.shape[0]):
        y_ref[n] = yb[:, n * R:(n + 1) * R]


def _bn_relu_conv2_kernel(y1_ref, ss_ref, w_ref, y2_ref, stats_ref,
                          patches_ref, *, W, R):
    ss = ss_ref[...]                                         # [C, 2] f32
    scale = ss[:, 0:1][None]                                 # [1, C, 1]
    shift = ss[:, 1:2][None]
    a = jnp.maximum(y1_ref[...].astype(jnp.float32) * scale + shift, 0.0)
    _build_patches(patches_ref, a, W=W, R=R)
    y2 = jnp.dot(w_ref[...], patches_ref[...],
                 preferred_element_type=jnp.float32)         # [Cout, Nb*R] f32

    @pl.when(pl.program_id(0) == 0)
    def _():
        stats_ref[...] = jnp.zeros_like(stats_ref)
    stats_ref[...] += _partial_stats(y2)

    for n in range(y2_ref.shape[0]):
        y2_ref[n] = y2[:, n * R:(n + 1) * R]                 # f32 (precision path)


def _bn_add_relu_kernel(y2_ref, x_ref, ss_ref, out_ref):
    ss = ss_ref[...]
    scale = ss[:, 0:1][None]
    shift = ss[:, 1:2][None]
    out_ref[...] = jnp.maximum(y2_ref[...] * scale + shift + x_ref[...], 0.0)


# --------------------------------------------------------------------------
# wrapper
# --------------------------------------------------------------------------
def _fold_bn(sums, gamma, beta, count):
    """Fold accumulated (sum, sum_sq) into BN scale/shift ([C, 2])."""
    mean = sums[:, 0] / count
    # TODO(synk): single-pass E[y^2]-mean^2 can cancel for large-mean
    # activations; a shifted/Welford combine would be more robust.
    var = jnp.maximum(sums[:, 1] / count - mean * mean, 0.0)  # biased variance
    scale = gamma * jax.lax.rsqrt(var + EPS)
    shift = beta - mean * scale
    return jnp.stack([scale, shift], axis=1).astype(jnp.float32)


def _pick_nb(N, C, R, Kp):
    """Images per grid step: VMEM-budgeted, capped, divides N."""
    # pass-2 per-image bytes: bf16 in slab (2x buf) + f32 out slab (2x buf)
    # + bf16 patches scratch + ~3 f32-slab-sized temporaries.
    per_img = (2 * C * R * 2) + (2 * C * R * 4) + (Kp * R * 2) + (3 * C * R * 4)
    budget = 16 * 1024 * 1024        # conservative: leaves headroom on v7x (64 MiB VMEM)
    nb = max(1, min(N, 8, budget // per_img))
    if N >= 8 and N // nb < 4:       # keep a few steps for DMA/compute overlap
        nb = max(1, N // 4)
    while N % nb:
        nb -= 1
    return nb


@jax.jit
def basic_block(x_nchw, w1_hwio, g1, b1, w2_hwio, g2, b2):
    """x_nchw: [N, C, H, W]; w*_hwio: [3, 3, Cin, Cout]; g*, b*: [Cout]."""
    N, C, H, W = x_nchw.shape
    R = H * W
    Cout = w1_hwio.shape[-1]
    assert C == Cout, "identity residual requires inplanes == planes"
    assert C % 8 == 0 and H >= 2 and W >= 2

    Kp = _round_up(9 * C, 16)            # bf16 packed-tile aligned contraction dim
    Nb = _pick_nb(N, C, R, Kp)
    G = N // Nb

    # channel-major slabs: NCHW -> [N, C, H*W] (reshape only, no transpose).
    # A single f32 copy serves pass 1 (cast to bf16 in-kernel) and pass 3's residual.
    x3 = x_nchw.reshape(N, C, R).astype(jnp.float32)

    # weights: HWIO -> [Cout, 9*Cin], k = (kh*3+kw)*Cin + ci, zero-padded to Kp, bf16
    def pack_w(w_hwio):
        w = jnp.transpose(w_hwio, (3, 0, 1, 2)).reshape(Cout, 9 * C)
        return jnp.pad(w, ((0, 0), (0, Kp - 9 * C))).astype(jnp.bfloat16)

    w1 = pack_w(w1_hwio)
    w2 = pack_w(w2_hwio)

    slab_spec = pl.BlockSpec((Nb, Cout, R), lambda i: (i, 0, 0))
    w_spec = pl.BlockSpec((Cout, Kp), lambda i: (0, 0))
    cvec_spec = pl.BlockSpec((Cout, 2), lambda i: (0, 0))     # stats acc / scale-shift

    # vmem_limit: above v5e's 16 MiB scoped default, <= physical on all gens.
    cparams_acc = pltpu.CompilerParams(
        dimension_semantics=("arbitrary",),    # stats accumulate across grid steps
        vmem_limit_bytes=32 * 1024 * 1024)
    cparams_par = pltpu.CompilerParams(
        dimension_semantics=("parallel",),
        vmem_limit_bytes=32 * 1024 * 1024)

    conv_flops = 2 * N * R * (9 * C) * Cout
    slab_f32 = N * Cout * R * 4
    slab_bf16 = N * Cout * R * 2

    # ---- pass 1: conv1 + accumulated bn1 stats -----------------------------
    y1, sums1 = pl.pallas_call(
        functools.partial(_conv1_kernel, W=W, R=R),
        grid=(G,),
        in_specs=[slab_spec, w_spec],
        out_specs=(slab_spec, cvec_spec),
        out_shape=(jax.ShapeDtypeStruct((N, Cout, R), jnp.bfloat16),
                   jax.ShapeDtypeStruct((Cout, 2), jnp.float32)),
        scratch_shapes=[pltpu.VMEM((Kp, Nb * R), jnp.bfloat16)],
        compiler_params=cparams_acc,
        cost_estimate=pl.CostEstimate(
            flops=conv_flops, transcendentals=0,
            bytes_accessed=slab_f32 + slab_bf16 + w1.size * 2),
    )(x3, w1)

    ss1 = _fold_bn(sums1, g1, b1, float(N * R))

    # ---- pass 2: bn1 + relu + conv2 + accumulated bn2 stats -----------------
    y2, sums2 = pl.pallas_call(
        functools.partial(_bn_relu_conv2_kernel, W=W, R=R),
        grid=(G,),
        in_specs=[slab_spec, cvec_spec, w_spec],
        out_specs=(slab_spec, cvec_spec),
        out_shape=(jax.ShapeDtypeStruct((N, Cout, R), jnp.float32),
                   jax.ShapeDtypeStruct((Cout, 2), jnp.float32)),
        scratch_shapes=[pltpu.VMEM((Kp, Nb * R), jnp.bfloat16)],
        compiler_params=cparams_acc,
        cost_estimate=pl.CostEstimate(
            flops=conv_flops + 3 * N * Cout * R, transcendentals=0,
            bytes_accessed=slab_bf16 + slab_f32 + w2.size * 2),
    )(y1, ss1, w2)

    ss2 = _fold_bn(sums2, g2, b2, float(N * R))

    # ---- pass 3: bn2 + residual add + relu ----------------------------------
    out3 = pl.pallas_call(
        _bn_add_relu_kernel,
        grid=(G,),
        in_specs=[slab_spec, slab_spec, cvec_spec],
        out_specs=slab_spec,
        out_shape=jax.ShapeDtypeStruct((N, Cout, R), jnp.float32),
        compiler_params=cparams_par,
        cost_estimate=pl.CostEstimate(
            flops=4 * N * Cout * R, transcendentals=0,
            bytes_accessed=3 * slab_f32),
    )(y2, x3, ss2)

    return out3.reshape(N, C, H, W)


# --------------------------------------------------------------------------
# pure-JAX reference mirroring the kernel's mixed precision: bf16 conv inputs
# (MXU, f32 accumulation), bf16 inter-pass y1 slab, f32 BN stats / residual.
# --------------------------------------------------------------------------
@jax.jit
def _reference(x_nchw, w1_hwio, g1, b1, w2_hwio, g2, b2):
    def conv(x_nhwc, w):
        return jax.lax.conv_general_dilated(
            x_nhwc.astype(jnp.bfloat16), w.astype(jnp.bfloat16),
            window_strides=(1, 1), padding=((1, 1), (1, 1)),
            dimension_numbers=("NHWC", "HWIO", "NHWC"),
            preferred_element_type=jnp.float32)

    def bn_stats(y):
        mean = jnp.mean(y, axis=(0, 1, 2), keepdims=True)
        var = jnp.mean((y - mean) ** 2, axis=(0, 1, 2), keepdims=True)
        return mean, var

    x = jnp.transpose(x_nchw, (0, 2, 3, 1)).astype(jnp.float32)
    y1 = conv(x, w1_hwio)                                    # f32
    m1, v1 = bn_stats(y1)                                    # stats from f32
    y1 = y1.astype(jnp.bfloat16).astype(jnp.float32)         # bf16 inter-pass slab
    a = jnp.maximum((y1 - m1) * jax.lax.rsqrt(v1 + EPS) * g1 + b1, 0.0)
    y2 = conv(a, w2_hwio)
    m2, v2 = bn_stats(y2)
    out = jnp.maximum((y2 - m2) * jax.lax.rsqrt(v2 + EPS) * g2 + b2 + x, 0.0)
    return jnp.transpose(out, (0, 3, 1, 2))


if __name__ == "__main__":
    # stride=1, downsample=None => inplanes must equal planes
    N, C, H, W = 2, 8, 16, 16

    key = jax.random.PRNGKey(0)
    kx, kw1, kw2, kg1, kb1, kg2, kb2 = jax.random.split(key, 7)

    x = jax.random.normal(kx, (N, C, H, W), jnp.float32)
    w1 = jax.random.normal(kw1, (3, 3, C, C), jnp.float32) * 0.1   # conv1 (HWIO)
    w2 = jax.random.normal(kw2, (3, 3, C, C), jnp.float32) * 0.1   # conv2 (HWIO)
    g1 = 1.0 + 0.1 * jax.random.normal(kg1, (C,), jnp.float32)     # bn1 gamma
    b1 = 0.1 * jax.random.normal(kb1, (C,), jnp.float32)           # bn1 beta
    g2 = 1.0 + 0.1 * jax.random.normal(kg2, (C,), jnp.float32)     # bn2 gamma
    b2 = 0.1 * jax.random.normal(kb2, (C,), jnp.float32)           # bn2 beta

    out = jax.block_until_ready(basic_block(x, w1, g1, b1, w2, g2, b2))
    ref = jax.block_until_ready(_reference(x, w1, g1, b1, w2, g2, b2))

    assert out.shape == (N, C, H, W)
    max_err = float(jnp.max(jnp.abs(out - ref)))
    assert jnp.allclose(out, ref, rtol=2e-3, atol=2e-3), max_err

    print("KERNEL_OK")
</pallas_src>

<mosaic_0001>
module attributes {stable_mosaic.version = 11 : i64} {
  func.func @_bn_add_relu_kernel(%arg0: i32, %arg1: memref<2x8x256xf32, #tpu.memory_space<vmem>>, %arg2: memref<2x8x256xf32, #tpu.memory_space<vmem>>, %arg3: memref<8x2xf32, #tpu.memory_space<vmem>>, %arg4: memref<2x8x256xf32, #tpu.memory_space<vmem>>) attributes {dimension_semantics = [#tpu.dimension_semantics<parallel>], iteration_bounds = array<i64: 1>, scalar_prefetch = 0 : i64, scratch_operands = 0 : i64, tpu.core_type = #tpu.core_type<tc>, window_params = [{transform_indices = @transform_0, window_bounds = array<i64: 2, 8, 256>}, {transform_indices = @transform_1, window_bounds = array<i64: 2, 8, 256>}, {pipeline_mode = #tpu.pipeline_mode<synchronous>, transform_indices = @transform_2, window_bounds = array<i64: 8, 2>}, {transform_indices = @transform_3, window_bounds = array<i64: 2, 8, 256>}]} {
    %c0 = arith.constant 0 : index
    %c0_0 = arith.constant 0 : index
    %0 = vector.load %arg3[%c0, %c0_0] : memref<8x2xf32, #tpu.memory_space<vmem>>, vector<8x2xf32>
    %1 = vector.extract_strided_slice %0 {offsets = [0, 0], sizes = [8, 1], strides = [1, 1]} : vector<8x2xf32> to vector<8x1xf32>
    %2 = vector.shape_cast %1 : vector<8x1xf32> to vector<1x8x1xf32>
    %3 = vector.extract_strided_slice %0 {offsets = [0, 1], sizes = [8, 1], strides = [1, 1]} : vector<8x2xf32> to vector<8x1xf32>
    %4 = vector.shape_cast %3 : vector<8x1xf32> to vector<1x8x1xf32>
    %c0_1 = arith.constant 0 : index
    %c0_2 = arith.constant 0 : index
    %c0_3 = arith.constant 0 : index
    %5 = vector.load %arg1[%c0_1, %c0_2, %c0_3] : memref<2x8x256xf32, #tpu.memory_space<vmem>>, vector<2x8x256xf32>
    %6 = vector.broadcast %2 : vector<1x8x1xf32> to vector<2x8x256xf32>
    %7 = arith.mulf %5, %6 : vector<2x8x256xf32>
    %8 = vector.broadcast %4 : vector<1x8x1xf32> to vector<2x8x256xf32>
    %9 = arith.addf %7, %8 : vector<2x8x256xf32>
    %c0_4 = arith.constant 0 : index
    %c0_5 = arith.constant 0 : index
    %c0_6 = arith.constant 0 : index
    %10 = vector.load %arg2[%c0_4, %c0_5, %c0_6] : memref<2x8x256xf32, #tpu.memory_space<vmem>>, vector<2x8x256xf32>
    %11 = arith.addf %9, %10 : vector<2x8x256xf32>
    %cst = arith.constant 0.000000e+00 : f32
    %12 = vector.broadcast %cst : f32 to vector<2x8x256xf32>
    %13 = arith.maximumf %11, %12 : vector<2x8x256xf32>
    %c0_7 = arith.constant 0 : index
    %c0_8 = arith.constant 0 : index
    %c0_9 = arith.constant 0 : index
    %14 = vector.load %arg4[%c0_7, %c0_8, %c0_9] : memref<2x8x256xf32, #tpu.memory_space<vmem>>, vector<2x8x256xf32>
    tpu.vector_store %arg4[%c0_7, %c0_8, %c0_9], %13 {strides = array<i32>} : memref<2x8x256xf32, #tpu.memory_space<vmem>>, vector<2x8x256xf32>,
    return
  }
  func.func @transform_0(%arg0: i32) -> (i32, i32, i32) {
    %c0_i32 = arith.constant 0 : i32
    %c0_i32_0 = arith.constant 0 : i32
    %c0_i32_1 = arith.constant 0 : i32
    return %arg0, %c0_i32, %c0_i32_0 : i32, i32, i32
  }
  func.func @transform_1(%arg0: i32) -> (i32, i32, i32) {
    %c0_i32 = arith.constant 0 : i32
    %c0_i32_0 = arith.constant 0 : i32
    %c0_i32_1 = arith.constant 0 : i32
    return %arg0, %c0_i32, %c0_i32_0 : i32, i32, i32
  }
  func.func @transform_2(%arg0: i32) -> (i32, i32) {
    %c0_i32 = arith.constant 0 : i32
    %c0_i32_0 = arith.constant 0 : i32
    %c0_i32_1 = arith.constant 0 : i32
    return %c0_i32, %c0_i32_0 : i32, i32
  }
  func.func @transform_3(%arg0: i32) -> (i32, i32, i32) {
    %c0_i32 = arith.constant 0 : i32
    %c0_i32_0 = arith.constant 0 : i32
    %c0_i32_1 = arith.constant 0 : i32
    return %arg0, %c0_i32, %c0_i32_0 : i32, i32, i32
  }
}

module attributes {stable_mosaic.version = 11 : i64} {
  func.func @_conv1_kernel(%arg0: i32, %arg1: memref<2x8x256xf32, #tpu.memory_space<vmem>>, %arg2: memref<8x80xbf16, #tpu.memory_space<vmem>>, %arg3: memref<2x8x256xbf16, #tpu.memory_space<vmem>>, %arg4: memref<8x2xf32, #tpu.memory_space<vmem>>, %arg5: memref<80x512xbf16, #tpu.memory_space<vmem>>) attributes {dimension_semantics = [#tpu.dimension_semantics<arbitrary>], iteration_bounds = array<i64: 1>, scalar_prefetch = 0 : i64, scratch_operands = 1 : i64, tpu.core_type = #tpu.core_type<tc>, window_params = [{transform_indices = @transform_0, window_bounds = array<i64: 2, 8, 256>}, {pipeline_mode = #tpu.pipeline_mode<synchronous>, transform_indices = @transform_1, window_bounds = array<i64: 8, 80>}, {transform_indices = @transform_2, window_bounds = array<i64: 2, 8, 256>}, {pipeline_mode = #tpu.pipeline_mode<synchronous>, transform_indices = @transform_3, window_bounds = array<i64: 8, 2>}]} {
    %c0 = arith.constant 0 : index
    %c0_0 = arith.constant 0 : index
    %c0_1 = arith.constant 0 : index
    %0 = vector.load %arg1[%c0, %c0_0, %c0_1] : memref<2x8x256xf32, #tpu.memory_space<vmem>>, vector<2x8x256xf32>
    %1 = tpu.iota {dimensions = array<i32: 1>} : vector<1x256xi32>
    %c16_i32 = arith.constant 16 : i32
    %c0_i32 = arith.constant 0 : i32
    %2 = arith.cmpi eq, %c16_i32, %c0_i32 : i32
    %c1_i32 = arith.constant 1 : i32
    %3 = arith.select %2, %c1_i32, %c16_i32 : i32
    %4 = vector.broadcast %3 : i32 to vector<1x256xi32>
    %5 = arith.remsi %1, %4 : vector<1x256xi32>
    %c0_i32_2 = arith.constant 0 : i32
    %6 = vector.broadcast %c0_i32_2 : i32 to vector<1x256xi32>
    %7 = arith.cmpi ne, %5, %6 : vector<1x256xi32>
    %c0_i32_3 = arith.constant 0 : i32
    %8 = vector.broadcast %c0_i32_3 : i32 to vector<1x256xi32>
    %9 = arith.cmpi slt, %5, %8 : vector<1x256xi32>
    %c0_i32_4 = arith.constant 0 : i32
    %10 = arith.cmpi slt, %3, %c0_i32_4 : i32
    %11 = vector.broadcast %10 : i1 to vector<1x256xi1>
    %12 = vector.broadcast %11 : vector<1x256xi1> to vector<1x256xi1>
    %13 = arith.xori %9, %12 : vector<1x256xi1>
    %14 = arith.andi %13, %7 : vector<1x256xi1>
    %15 = vector.broadcast %3 : i32 to vector<1x256xi32>
    %16 = arith.addi %5, %15 : vector<1x256xi32>
    %17 = arith.select %14, %16, %5 : vector<1x256xi1>, vector<1x256xi32>
    %c1_i32_5 = arith.constant 1 : i32
    %18 = vector.broadcast %c1_i32_5 : i32 to vector<1x256xi32>
    %19 = arith.cmpi sge, %17, %18 : vector<1x256xi32>
    %c14_i32 = arith.constant 14 : i32
    %20 = vector.broadcast %c14_i32 : i32 to vector<1x256xi32>
    %21 = arith.cmpi sle, %17, %20 : vector<1x256xi32>
    %c16_i32_6 = arith.constant 16 : i32
    %22 = vector.broadcast %c16_i32_6 : i32 to vector<1x256xi32>
    %23 = arith.cmpi sge, %1, %22 : vector<1x256xi32>
    %c240_i32 = arith.constant 240 : i32
    %24 = vector.broadcast %c240_i32 : i32 to vector<1x256xi32>
    %25 = arith.cmpi slt, %1, %24 : vector<1x256xi32>
    %26 = arith.andi %23, %19 : vector<1x256xi1>
    %27 = arith.andi %23, %21 : vector<1x256xi1>
    %28 = arith.andi %25, %19 : vector<1x256xi1>
    %29 = arith.andi %25, %21 : vector<1x256xi1>
    %30 = vector.extract_strided_slice %0 {offsets = [0, 0, 0], sizes = [1, 8, 256], strides = [1, 1, 1]} : vector<2x8x256xf32> to vector<1x8x256xf32>
    %31 = vector.shape_cast %30 : vector<1x8x256xf32> to vector<8x256xf32>
    %c17_i32 = arith.constant 17 : i32
    %32 = tpu.dynamic_rotate %31 by %c17_i32 dim 1 : vector<8x256xf32>, i32 -> vector<8x256xf32>
    %cst = arith.constant 0.000000e+00 : f32
    %33 = vector.shape_cast %26 : vector<1x256xi1> to vector<1x256xi1>
    %34 = vector.broadcast %33 : vector<1x256xi1> to vector<8x256xi1>
    %35 = vector.broadcast %cst : f32 to vector<8x256xf32>
    %36 = arith.select %34, %32, %35 : vector<8x256xi1>, vector<8x256xf32>
    %c16_i32_7 = arith.constant 16 : i32
    %37 = tpu.dynamic_rotate %31 by %c16_i32_7 dim 1 : vector<8x256xf32>, i32 -> vector<8x256xf32>
    %cst_8 = arith.constant 0.000000e+00 : f32
    %38 = vector.shape_cast %23 : vector<1x256xi1> to vector<1x256xi1>
    %39 = vector.broadcast %38 : vector<1x256xi1> to vector<8x256xi1>
    %40 = vector.broadcast %cst_8 : f32 to vector<8x256xf32>
    %41 = arith.select %39, %37, %40 : vector<8x256xi1>, vector<8x256xf32>
    %c15_i32 = arith.constant 15 : i32
    %42 = tpu.dynamic_rotate %31 by %c15_i32 dim 1 : vector<8x256xf32>, i32 -> vector<8x256xf32>
    %cst_9 = arith.constant 0.000000e+00 : f32
    %43 = vector.shape_cast %27 : vector<1x256xi1> to vector<1x256xi1>
    %44 = vector.broadcast %43 : vector<1x256xi1> to vector<8x256xi1>
    %45 = vector.broadcast %cst_9 : f32 to vector<8x256xf32>
    %46 = arith.select %44, %42, %45 : vector<8x256xi1>, vector<8x256xf32>
    %c1_i32_10 = arith.constant 1 : i32
    %47 = tpu.dynamic_rotate %31 by %c1_i32_10 dim 1 : vector<8x256xf32>, i32 -> vector<8x256xf32>
    %cst_11 = arith.constant 0.000000e+00 : f32
    %48 = vector.shape_cast %19 : vector<1x256xi1> to vector<1x256xi1>
    %49 = vector.broadcast %48 : vector<1x256xi1> to vector<8x256xi1>
    %50 = vector.broadcast %cst_11 : f32 to vector<8x256xf32>
    %51 = arith.select %49, %47, %50 : vector<8x256xi1>, vector<8x256xf32>
    %c255_i32 = arith.constant 255 : i32
    %52 = tpu.dynamic_rotate %31 by %c255_i32 dim 1 : vector<8x256xf32>, i32 -> vector<8x256xf32>
    %cst_12 = arith.constant 0.000000e+00 : f32
    %53 = vector.shape_cast %21 : vector<1x256xi1> to vector<1x256xi1>
    %54 = vector.broadcast %53 : vector<1x256xi1> to vector<8x256xi1>
    %55 = vector.broadcast %cst_12 : f32 to vector<8x256xf32>
    %56 = arith.select %54, %52, %55 : vector<8x256xi1>, vector<8x256xf32>
    %c241_i32 = arith.constant 241 : i32
    %57 = tpu.dynamic_rotate %31 by %c241_i32 dim 1 : vector<8x256xf32>, i32 -> vector<8x256xf32>
    %cst_13 = arith.constant 0.000000e+00 : f32
    %58 = vector.shape_cast %28 : vector<1x256xi1> to vector<1x256xi1>
    %59 = vector.broadcast %58 : vector<1x256xi1> to vector<8x256xi1>
    %60 = vector.broadcast %cst_13 : f32 to vector<8x256xf32>
    %61 = arith.select %59, %57, %60 : vector<8x256xi1>, vector<8x256xf32>
    %c240_i32_14 = arith.constant 240 : i32
    %62 = tpu.dynamic_rotate %31 by %c240_i32_14 dim 1 : vector<8x256xf32>, i32 -> vector<8x256xf32>
    %cst_15 = arith.constant 0.000000e+00 : f32
    %63 = vector.shape_cast %25 : vector<1x256xi1> to vector<1x256xi1>
    %64 = vector.broadcast %63 : vector<1x256xi1> to vector<8x256xi1>
    %65 = vector.broadcast %cst_15 : f32 to vector<8x256xf32>
    %66 = arith.select %64, %62, %65 : vector<8x256xi1>, vector<8x256xf32>
    %c239_i32 = arith.constant 239 : i32
    %67 = tpu.dynamic_rotate %31 by %c239_i32 dim 1 : vector<8x256xf32>, i32 -> vector<8x256xf32>
    %cst_16 = arith.constant 0.000000e+00 : f32
    %68 = vector.shape_cast %29 : vector<1x256xi1> to vector<1x256xi1>
    %69 = vector.broadcast %68 : vector<1x256xi1> to vector<8x256xi1>
    %70 = vector.broadcast %cst_16 : f32 to vector<8x256xf32>
    %71 = arith.select %69, %67, %70 : vector<8x256xi1>, vector<8x256xf32>
    %72 = tpu.concatenate %36, %41 in 0 : vector<8x256xf32>, vector<8x256xf32> -> vector<16x256xf32>
    %73 = arith.truncf %72 : vector<16x256xf32> to vector<16x256xbf16>
    %c0_17 = arith.constant 0 : index
    %c0_18 = arith.constant 0 : index
    %74 = vector.load %arg5[%c0_17, %c0_18] : memref<80x512xbf16, #tpu.memory_space<vmem>>, vector<16x256xbf16>
    tpu.vector_store %arg5[%c0_17, %c0_18], %73 {strides = array<i32>} : memref<80x512xbf16, #tpu.memory_space<vmem>>, vector<16x256xbf16>,
    %75 = tpu.concatenate %46, %51 in 0 : vector<8x256xf32>, vector<8x256xf32> -> vector<16x256xf32>
    %76 = arith.truncf %75 : vector<16x256xf32> to vector<16x256xbf16>
    %c16 = arith.constant 16 : index
    %c0_19 = arith.constant 0 : index
    %77 = vector.load %arg5[%c16, %c0_19] : memref<80x512xbf16, #tpu.memory_space<vmem>>, vector<16x256xbf16>
    tpu.vector_store %arg5[%c16, %c0_19], %76 {strides = array<i32>} : memref<80x512xbf16, #tpu.memory_space<vmem>>, vector<16x256xbf16>,
    %78 = tpu.concatenate %31, %56 in 0 : vector<8x256xf32>, vector<8x256xf32> -> vector<16x256xf32>
    %79 = arith.truncf %78 : vector<16x256xf32> to vector<16x256xbf16>
    %c32 = arith.constant 32 : index
    %c0_20 = arith.constant 0 : index
    %80 = vector.load %arg5[%c32, %c0_20] : memref<80x512xbf16, #tpu.memory_space<vmem>>, vector<16x256xbf16>
    tpu.vector_store %arg5[%c32, %c0_20], %79 {strides = array<i32>} : memref<80x512xbf16, #tpu.memory_space<vmem>>, vector<16x256xbf16>,
    %81 = tpu.concatenate %61, %66 in 0 : vector<8x256xf32>, vector<8x256xf32> -> vector<16x256xf32>
    %82 = arith.truncf %81 : vector<16x256xf32> to vector<16x256xbf16>
    %c48 = arith.constant 48 : index
    %c0_21 = arith.constant 0 : index
    %83 = vector.load %arg5[%c48, %c0_21] : memref<80x512xbf16, #tpu.memory_space<vmem>>, vector<16x256xbf16>
    tpu.vector_store %arg5[%c48, %c0_21], %82 {strides = array<i32>} : memref<80x512xbf16, #tpu.memory_space<vmem>>, vector<16x256xbf16>,
    %cst_22 = arith.constant 0.000000e+00 : f32
    %84 = vector.broadcast %cst_22 : f32 to vector<8x256xf32>
    %85 = tpu.concatenate %71, %84 in 0 : vector<8x256xf32>, vector<8x256xf32> -> vector<16x256xf32>
    %86 = arith.truncf %85 : vector<16x256xf32> to vector<16x256xbf16>
    %c64 = arith.constant 64 : index
    %c0_23 = arith.constant 0 : index
    %87 = vector.load %arg5[%c64, %c0_23] : memref<80x512xbf16, #tpu.memory_space<vmem>>, vector<16x256xbf16>
    tpu.vector_store %arg5[%c64, %c0_23], %86 {strides = array<i32>} : memref<80x512xbf16, #tpu.memory_space<vmem>>, vector<16x256xbf16>,
    %88 = vector.extract_strided_slice %0 {offsets = [1, 0, 0], sizes = [1, 8, 256], strides = [1, 1, 1]} : vector<2x8x256xf32> to vector<1x8x256xf32>
    %89 = vector.shape_cast %88 : vector<1x8x256xf32> to vector<8x256xf32>
    %c17_i32_24 = arith.constant 17 : i32
    %90 = tpu.dynamic_rotate %89 by %c17_i32_24 dim 1 : vector<8x256xf32>, i32 -> vector<8x256xf32>
    %cst_25 = arith.constant 0.000000e+00 : f32
    %91 = vector.shape_cast %26 : vector<1x256xi1> to vector<1x256xi1>
    %92 = vector.broadcast %91 : vector<1x256xi1> to vector<8x256xi1>
    %93 = vector.broadcast %cst_25 : f32 to vector<8x256xf32>
    %94 = arith.select %92, %90, %93 : vector<8x256xi1>, vector<8x256xf32>
    %c16_i32_26 = arith.constant 16 : i32
    %95 = tpu.dynamic_rotate %89 by %c16_i32_26 dim 1 : vector<8x256xf32>, i32 -> vector<8x256xf32>
    %cst_27 = arith.constant 0.000000e+00 : f32
    %96 = vector.shape_cast %23 : vector<1x256xi1> to vector<1x256xi1>
    %97 = vector.broadcast %96 : vector<1x256xi1> to vector<8x256xi1>
    %98 = vector.broadcast %cst_27 : f32 to vector<8x256xf32>
    %99 = arith.select %97, %95, %98 : vector<8x256xi1>, vector<8x256xf32>
    %c15_i32_28 = arith.constant 15 : i32
    %100 = tpu.dynamic_rotate %89 by %c15_i32_28 dim 1 : vector<8x256xf32>, i32 -> vector<8x256xf32>
    %cst_29 = arith.constant 0.000000e+00 : f32
    %101 = vector.shape_cast %27 : vector<1x256xi1> to vector<1x256xi1>
    %102 = vector.broadcast %101 : vector<1x256xi1> to vector<8x256xi1>
    %103 = vector.broadcast %cst_29 : f32 to vector<8x256xf32>
    %104 = arith.select %102, %100, %103 : vector<8x256xi1>, vector<8x256xf32>
    %c1_i32_30 = arith.constant 1 : i32
    %105 = tpu.dynamic_rotate %89 by %c1_i32_30 dim 1 : vector<8x256xf32>, i32 -> vector<8x256xf32>
    %cst_31 = arith.constant 0.000000e+00 : f32
    %106 = vector.shape_cast %19 : vector<1x256xi1> to vector<1x256xi1>
    %107 = vector.broadcast %106 : vector<1x256xi1> to vector<8x256xi1>
    %108 = vector.broadcast %cst_31 : f32 to vector<8x256xf32>
    %109 = arith.select %107, %105, %108 : vector<8x256xi1>, vector<8x256xf32>
    %c255_i32_32 = arith.constant 255 : i32
    %110 = tpu.dynamic_rotate %89 by %c255_i32_32 dim 1 : vector<8x256xf32>, i32 -> vector<8x256xf32>
    %cst_33 = arith.constant 0.000000e+00 : f32
    %111 = vector.shape_cast %21 : vector<1x256xi1> to vector<1x256xi1>
    %112 = vector.broadcast %111 : vector<1x256xi1> to vector<8x256xi1>
    %113 = vector.broadcast %cst_33 : f32 to vector<8x256xf32>
    %114 = arith.select %112, %110, %113 : vector<8x256xi1>, vector<8x256xf32>
    %c241_i32_34 = arith.constant 241 : i32
    %115 = tpu.dynamic_rotate %89 by %c241_i32_34 dim 1 : vector<8x256xf32>, i32 -> vector<8x256xf32>
    %cst_35 = arith.constant 0.000000e+00 : f32
    %116 = vector.shape_cast %28 : vector<1x256xi1> to vector<1x256xi1>
    %117 = vector.broadcast %116 : vector<1x256xi1> to vector<8x256xi1>
    %118 = vector.broadcast %cst_35 : f32 to vector<8x256xf32>
    %119 = arith.select %117, %115, %118 : vector<8x256xi1>, vector<8x256xf32>
    %c240_i32_36 = arith.constant 240 : i32
    %120 = tpu.dynamic_rotate %89 by %c240_i32_36 dim 1 : vector<8x256xf32>, i32 -> vector<8x256xf32>
    %cst_37 = arith.constant 0.000000e+00 : f32
    %121 = vector.shape_cast %25 : vector<1x256xi1> to vector<1x256xi1>
    %122 = vector.broadcast %121 : vector<1x256xi1> to vector<8x256xi1>
    %123 = vector.broadcast %cst_37 : f32 to vector<8x256xf32>
    %124 = arith.select %122, %120, %123 : vector<8x256xi1>, vector<8x256xf32>
    %c239_i32_38 = arith.constant 239 : i32
    %125 = tpu.dynamic_rotate %89 by %c239_i32_38 dim 1 : vector<8x256xf32>, i32 -> vector<8x256xf32>
    %cst_39 = arith.constant 0.000000e+00 : f32
    %126 = vector.shape_cast %29 : vector<1x256xi1> to vector<1x256xi1>
    %127 = vector.broadcast %126 : vector<1x256xi1> to vector<8x256xi1>
    %128 = vector.broadcast %cst_39 : f32 to vector<8x256xf32>
    %129 = arith.select %127, %125, %128 : vector<8x256xi1>, vector<8x256xf32>
    %130 = tpu.concatenate %94, %99 in 0 : vector<8x256xf32>, vector<8x256xf32> -> vector<16x256xf32>
    %131 = arith.truncf %130 : vector<16x256xf32> to vector<16x256xbf16>
    %c0_40 = arith.constant 0 : index
    %c256 = arith.constant 256 : index
    %132 = vector.load %arg5[%c0_40, %c256] : memref<80x512xbf16, #tpu.memory_space<vmem>>, vector<16x256xbf16>
    tpu.vector_store %arg5[%c0_40, %c256], %131 {strides = array<i32>} : memref<80x512xbf16, #tpu.memory_space<vmem>>, vector<16x256xbf16>,
    %133 = tpu.concatenate %104, %109 in 0 : vector<8x256xf32>, vector<8x256xf32> -> vector<16x256xf32>
    %134 = arith.truncf %133 : vector<16x256xf32> to vector<16x256xbf16>
    %c16_41 = arith.constant 16 : index
    %c256_42 = arith.constant 256 : index
    %135 = vector.load %arg5[%c16_41, %c256_42] : memref<80x512xbf16, #tpu.memory_space<vmem>>, vector<16x256xbf16>
    tpu.vector_store %arg5[%c16_41, %c256_42], %134 {strides = array<i32>} : memref<80x512xbf16, #tpu.memory_space<vmem>>, vector<16x256xbf16>,
    %136 = tpu.concatenate %89, %114 in 0 : vector<8x256xf32>, vector<8x256xf32> -> vector<16x256xf32>
    %137 = arith.truncf %136 : vector<16x256xf32> to vector<16x256xbf16>
    %c32_43 = arith.constant 32 : index
    %c256_44 = arith.constant 256 : index
    %138 = vector.load %arg5[%c32_43, %c256_44] : memref<80x512xbf16, #tpu.memory_space<vmem>>, vector<16x256xbf16>
    tpu.vector_store %arg5[%c32_43, %c256_44], %137 {strides = array<i32>} : memref<80x512xbf16, #tpu.memory_space<vmem>>, vector<16x256xbf16>,
    %139 = tpu.concatenate %119, %124 in 0 : vector<8x256xf32>, vector<8x256xf32> -> vector<16x256xf32>
    %140 = arith.truncf %139 : vector<16x256xf32> to vector<16x256xbf16>
    %c48_45 = arith.constant 48 : index
    %c256_46 = arith.constant 256 : index
    %141 = vector.load %arg5[%c48_45, %c256_46] : memref<80x512xbf16, #tpu.memory_space<vmem>>, vector<16x256xbf16>
    tpu.vector_store %arg5[%c48_45, %c256_46], %140 {strides = array<i32>} : memref<80x512xbf16, #tpu.memory_space<vmem>>, vector<16x256xbf16>,
    %cst_47 = arith.constant 0.000000e+00 : f32
    %142 = vector.broadcast %cst_47 : f32 to vector<8x256xf32>
    %143 = tpu.concatenate %129, %142 in 0 : vector<8x256xf32>, vector<8x256xf32> -> vector<16x256xf32>
    %144 = arith.truncf %143 : vector<16x256xf32> to vector<16x256xbf16>
    %c64_48 = arith.constant 64 : index
    %c256_49 = arith.constant 256 : index
    %145 = vector.load %arg5[%c64_48, %c256_49] : memref<80x512xbf16, #tpu.memory_space<vmem>>, vector<16x256xbf16>
    tpu.vector_store %arg5[%c64_48, %c256_49], %144 {strides = array<i32>} : memref<80x512xbf16, #tpu.memory_space<vmem>>, vector<16x256xbf16>,
    %c0_50 = arith.constant 0 : index
    %c0_51 = arith.constant 0 : index
    %146 = vector.load %arg2[%c0_50, %c0_51] : memref<8x80xbf16, #tpu.memory_space<vmem>>, vector<8x80xbf16>
    %c0_52 = arith.constant 0 : index
    %c0_53 = arith.constant 0 : index
    %147 = vector.load %arg5[%c0_52, %c0_53] : memref<80x512xbf16, #tpu.memory_space<vmem>>, vector<80x512xbf16>
    %cst_54 = arith.constant dense<0.000000e+00> : vector<8x512xf32>
    %148 = tpu.matmul %146, %147, %cst_54 {dimension_numbers = #tpu.dot_dimension_numbers<[1], [0], [0], [1], [0, 0, 1, 1], [], []>} : vector<8x80xbf16>, vector<80x512xbf16>, vector<8x512xf32> -> vector<8x512xf32>
    %c0_i32_55 = arith.constant 0 : i32
    %149 = arith.cmpi eq, %arg0, %c0_i32_55 : i32
    %150 = arith.extui %149 : i1 to i32
    %c0_i32_56 = arith.constant 0 : i32
    %151 = arith.cmpi ne, %150, %c0_i32_56 : i32
    scf.if %151 {
      %cst_68 = arith.constant 0.000000e+00 : f32
      %170 = vector.broadcast %cst_68 : f32 to vector<8x2xf32>
      %c0_69 = arith.constant 0 : index
      %c0_70 = arith.constant 0 : index
      %171 = vector.load %arg4[%c0_69, %c0_70] : memref<8x2xf32, #tpu.memory_space<vmem>>, vector<8x2xf32>
      tpu.vector_store %arg4[%c0_69, %c0_70], %170 {strides = array<i32>} : memref<8x2xf32, #tpu.memory_space<vmem>>, vector<8x2xf32>,
    } else {
    }
    %c0_57 = arith.constant 0 : index
    %c0_58 = arith.constant 0 : index
    %152 = vector.load %arg4[%c0_57, %c0_58] : memref<8x2xf32, #tpu.memory_space<vmem>>, vector<8x2xf32>
    %cst_59 = arith.constant dense<0.000000e+00> : vector<8xf32>
    %153 = vector.multi_reduction <add>, %148, %cst_59 [1] : vector<8x512xf32> to vector<8xf32>
    %154 = vector.shape_cast %153 : vector<8xf32> to vector<8x1xf32>
    %155 = arith.mulf %148, %148 : vector<8x512xf32>
    %cst_60 = arith.constant dense<0.000000e+00> : vector<8xf32>
    %156 = vector.multi_reduction <add>, %155, %cst_60 [1] : vector<8x512xf32> to vector<8xf32>
    %157 = vector.shape_cast %156 : vector<8xf32> to vector<8x1xf32>
    %158 = tpu.concatenate %154, %157 in 1 : vector<8x1xf32>, vector<8x1xf32> -> vector<8x2xf32>
    %159 = arith.addf %152, %158 : vector<8x2xf32>
    %c0_61 = arith.constant 0 : index
    %c0_62 = arith.constant 0 : index
    %160 = vector.load %arg4[%c0_61, %c0_62] : memref<8x2xf32, #tpu.memory_space<vmem>>, vector<8x2xf32>
    tpu.vector_store %arg4[%c0_61, %c0_62], %159 {strides = array<i32>} : memref<8x2xf32, #tpu.memory_space<vmem>>, vector<8x2xf32>,
    %161 = arith.truncf %148 : vector<8x512xf32> to vector<8x512xbf16>
    %162 = vector.extract_strided_slice %161 {offsets = [0, 0], sizes = [8, 256], strides = [1, 1]} : vector<8x512xbf16> to vector<8x256xbf16>
    %c0_63 = arith.constant 0 : index
    %c0_64 = arith.constant 0 : index
    %c0_65 = arith.constant 0 : index
    %163 = vector.load %arg3[%c0_63, %c0_64, %c0_65] : memref<2x8x256xbf16, #tpu.memory_space<vmem>>, vector<1x8x256xbf16>
    %164 = vector.shape_cast %163 : vector<1x8x256xbf16> to vector<8x256xbf16>
    %165 = vector.shape_cast %162 : vector<8x256xbf16> to vector<1x8x256xbf16>
    tpu.vector_store %arg3[%c0_63, %c0_64, %c0_65], %165 {strides = array<i32>} : memref<2x8x256xbf16, #tpu.memory_space<vmem>>, vector<1x8x256xbf16>,
    %166 = vector.extract_strided_slice %161 {offsets = [0, 256], sizes = [8, 256], strides = [1, 1]} : vector<8x512xbf16> to vector<8x256xbf16>
    %c1 = arith.constant 1 : index
    %c0_66 = arith.constant 0 : index
    %c0_67 = arith.constant 0 : index
    %167 = vector.load %arg3[%c1, %c0_66, %c0_67] : memref<2x8x256xbf16, #tpu.memory_space<vmem>>, vector<1x8x256xbf16>
    %168 = vector.shape_cast %167 : vector<1x8x256xbf16> to vector<8x256xbf16>
    %169 = vector.shape_cast %166 : vector<8x256xbf16> to vector<1x8x256xbf16>
    tpu.vector_store %arg3[%c1, %c0_66, %c0_67], %169 {strides = array<i32>} : memref<2x8x256xbf16, #tpu.memory_space<vmem>>, vector<1x8x256xbf16>,
    return
  }
  func.func @transform_0(%arg0: i32) -> (i32, i32, i32) {
    %c0_i32 = arith.constant 0 : i32
    %c0_i32_0 = arith.constant 0 : i32
    %c0_i32_1 = arith.constant 0 : i32
    return %arg0, %c0_i32, %c0_i32_0 : i32, i32, i32
  }
  func.func @transform_1(%arg0: i32) -> (i32, i32) {
    %c0_i32 = arith.constant 0 : i32
    %c0_i32_0 = arith.constant 0 : i32
    %c0_i32_1 = arith.constant 0 : i32
    return %c0_i32, %c0_i32_0 : i32, i32
  }
  func.func @transform_2(%arg0: i32) -> (i32, i32, i32) {
    %c0_i32 = arith.constant 0 : i32
    %c0_i32_0 = arith.constant 0 : i32
    %c0_i32_1 = arith.constant 0 : i32
    return %arg0, %c0_i32, %c0_i32_0 : i32, i32, i32
  }
  func.func @transform_3(%arg0: i32) -> (i32, i32) {
    %c0_i32 = arith.constant 0 : i32
    %c0_i32_0 = arith.constant 0 : i32
    %c0_i32_1 = arith.constant 0 : i32
    return %c0_i32, %c0_i32_0 : i32, i32
  }
}

module attributes {stable_mosaic.version = 11 : i64} {
  func.func @_bn_relu_conv2_kernel(%arg0: i32, %arg1: memref<2x8x256xbf16, #tpu.memory_space<vmem>>, %arg2: memref<8x2xf32, #tpu.memory_space<vmem>>, %arg3: memref<8x80xbf16, #tpu.memory_space<vmem>>, %arg4: memref<2x8x256xf32, #tpu.memory_space<vmem>>, %arg5: memref<8x2xf32, #tpu.memory_space<vmem>>, %arg6: memref<80x512xbf16, #tpu.memory_space<vmem>>) attributes {dimension_semantics = [#tpu.dimension_semantics<arbitrary>], iteration_bounds = array<i64: 1>, scalar_prefetch = 0 : i64, scratch_operands = 1 : i64, tpu.core_type = #tpu.core_type<tc>, window_params = [{transform_indices = @transform_0, window_bounds = array<i64: 2, 8, 256>}, {pipeline_mode = #tpu.pipeline_mode<synchronous>, transform_indices = @transform_1, window_bounds = array<i64: 8, 2>}, {pipeline_mode = #tpu.pipeline_mode<synchronous>, transform_indices = @transform_2, window_bounds = array<i64: 8, 80>}, {transform_indices = @transform_3, window_bounds = array<i64: 2, 8, 256>}, {pipeline_mode = #tpu.pipeline_mode<synchronous>, transform_indices = @transform_4, window_bounds = array<i64: 8, 2>}]} {
    %c0 = arith.constant 0 : index
    %c0_0 = arith.constant 0 : index
    %0 = vector.load %arg2[%c0, %c0_0] : memref<8x2xf32, #tpu.memory_space<vmem>>, vector<8x2xf32>
    %1 = vector.extract_strided_slice %0 {offsets = [0, 0], sizes = [8, 1], strides = [1, 1]} : vector<8x2xf32> to vector<8x1xf32>
    %2 = vector.shape_cast %1 : vector<8x1xf32> to vector<1x8x1xf32>
    %3 = vector.extract_strided_slice %0 {offsets = [0, 1], sizes = [8, 1], strides = [1, 1]} : vector<8x2xf32> to vector<8x1xf32>
    %4 = vector.shape_cast %3 : vector<8x1xf32> to vector<1x8x1xf32>
    %c0_1 = arith.constant 0 : index
    %c0_2 = arith.constant 0 : index
    %c0_3 = arith.constant 0 : index
    %5 = vector.load %arg1[%c0_1, %c0_2, %c0_3] : memref<2x8x256xbf16, #tpu.memory_space<vmem>>, vector<2x8x256xbf16>
    %6 = arith.extf %5 : vector<2x8x256xbf16> to vector<2x8x256xf32>
    %7 = vector.broadcast %2 : vector<1x8x1xf32> to vector<2x8x256xf32>
    %8 = arith.mulf %6, %7 : vector<2x8x256xf32>
    %9 = vector.broadcast %4 : vector<1x8x1xf32> to vector<2x8x256xf32>
    %10 = arith.addf %8, %9 : vector<2x8x256xf32>
    %cst = arith.constant 0.000000e+00 : f32
    %11 = vector.broadcast %cst : f32 to vector<2x8x256xf32>
    %12 = arith.maximumf %10, %11 : vector<2x8x256xf32>
    %13 = tpu.iota {dimensions = array<i32: 1>} : vector<1x256xi32>
    %c16_i32 = arith.constant 16 : i32
    %c0_i32 = arith.constant 0 : i32
    %14 = arith.cmpi eq, %c16_i32, %c0_i32 : i32
    %c1_i32 = arith.constant 1 : i32
    %15 = arith.select %14, %c1_i32, %c16_i32 : i32
    %16 = vector.broadcast %15 : i32 to vector<1x256xi32>
    %17 = arith.remsi %13, %16 : vector<1x256xi32>
    %c0_i32_4 = arith.constant 0 : i32
    %18 = vector.broadcast %c0_i32_4 : i32 to vector<1x256xi32>
    %19 = arith.cmpi ne, %17, %18 : vector<1x256xi32>
    %c0_i32_5 = arith.constant 0 : i32
    %20 = vector.broadcast %c0_i32_5 : i32 to vector<1x256xi32>
    %21 = arith.cmpi slt, %17, %20 : vector<1x256xi32>
    %c0_i32_6 = arith.constant 0 : i32
    %22 = arith.cmpi slt, %15, %c0_i32_6 : i32
    %23 = vector.broadcast %22 : i1 to vector<1x256xi1>
    %24 = vector.broadcast %23 : vector<1x256xi1> to vector<1x256xi1>
    %25 = arith.xori %21, %24 : vector<1x256xi1>
    %26 = arith.andi %25, %19 : vector<1x256xi1>
    %27 = vector.broadcast %15 : i32 to vector<1x256xi32>
    %28 = arith.addi %17, %27 : vector<1x256xi32>
    %29 = arith.select %26, %28, %17 : vector<1x256xi1>, vector<1x256xi32>
    %c1_i32_7 = arith.constant 1 : i32
    %30 = vector.broadcast %c1_i32_7 : i32 to vector<1x256xi32>
    %31 = arith.cmpi sge, %29, %30 : vector<1x256xi32>
    %c14_i32 = arith.constant 14 : i32
    %32 = vector.broadcast %c14_i32 : i32 to vector<1x256xi32>
    %33 = arith.cmpi sle, %29, %32 : vector<1x256xi32>
    %c16_i32_8 = arith.constant 16 : i32
    %34 = vector.broadcast %c16_i32_8 : i32 to vector<1x256xi32>
    %35 = arith.cmpi sge, %13, %34 : vector<1x256xi32>
    %c240_i32 = arith.constant 240 : i32
    %36 = vector.broadcast %c240_i32 : i32 to vector<1x256xi32>
    %37 = arith.cmpi slt, %13, %36 : vector<1x256xi32>
    %38 = arith.andi %35, %31 : vector<1x256xi1>
    %39 = arith.andi %35, %33 : vector<1x256xi1>
    %40 = arith.andi %37, %31 : vector<1x256xi1>
    %41 = arith.andi %37, %33 : vector<1x256xi1>
    %42 = vector.extract_strided_slice %12 {offsets = [0, 0, 0], sizes = [1, 8, 256], strides = [1, 1, 1]} : vector<2x8x256xf32> to vector<1x8x256xf32>
    %43 = vector.shape_cast %42 : vector<1x8x256xf32> to vector<8x256xf32>
    %c17_i32 = arith.constant 17 : i32
    %44 = tpu.dynamic_rotate %43 by %c17_i32 dim 1 : vector<8x256xf32>, i32 -> vector<8x256xf32>
    %cst_9 = arith.constant 0.000000e+00 : f32
    %45 = vector.shape_cast %38 : vector<1x256xi1> to vector<1x256xi1>
    %46 = vector.broadcast %45 : vector<1x256xi1> to vector<8x256xi1>
    %47 = vector.broadcast %cst_9 : f32 to vector<8x256xf32>
    %48 = arith.select %46, %44, %47 : vector<8x256xi1>, vector<8x256xf32>
    %c16_i32_10 = arith.constant 16 : i32
    %49 = tpu.dynamic_rotate %43 by %c16_i32_10 dim 1 : vector<8x256xf32>, i32 -> vector<8x256xf32>
    %cst_11 = arith.constant 0.000000e+00 : f32
    %50 = vector.shape_cast %35 : vector<1x256xi1> to vector<1x256xi1>
    %51 = vector.broadcast %50 : vector<1x256xi1> to vector<8x256xi1>
    %52 = vector.broadcast %cst_11 : f32 to vector<8x256xf32>
    %53 = arith.select %51, %49, %52 : vector<8x256xi1>, vector<8x256xf32>
    %c15_i32 = arith.constant 15 : i32
    %54 = tpu.dynamic_rotate %43 by %c15_i32 dim 1 : vector<8x256xf32>, i32 -> vector<8x256xf32>
    %cst_12 = arith.constant 0.000000e+00 : f32
    %55 = vector.shape_cast %39 : vector<1x256xi1> to vector<1x256xi1>
    %56 = vector.broadcast %55 : vector<1x256xi1> to vector<8x256xi1>
    %57 = vector.broadcast %cst_12 : f32 to vector<8x256xf32>
    %58 = arith.select %56, %54, %57 : vector<8x256xi1>, vector<8x256xf32>
    %c1_i32_13 = arith.constant 1 : i32
    %59 = tpu.dynamic_rotate %43 by %c1_i32_13 dim 1 : vector<8x256xf32>, i32 -> vector<8x256xf32>
    %cst_14 = arith.constant 0.000000e+00 : f32
    %60 = vector.shape_cast %31 : vector<1x256xi1> to vector<1x256xi1>
    %61 = vector.broadcast %60 : vector<1x256xi1> to vector<8x256xi1>
    %62 = vector.broadcast %cst_14 : f32 to vector<8x256xf32>
    %63 = arith.select %61, %59, %62 : vector<8x256xi1>, vector<8x256xf32>
    %c255_i32 = arith.constant 255 : i32
    %64 = tpu.dynamic_rotate %43 by %c255_i32 dim 1 : vector<8x256xf32>, i32 -> vector<8x256xf32>
    %cst_15 = arith.constant 0.000000e+00 : f32
    %65 = vector.shape_cast %33 : vector<1x256xi1> to vector<1x256xi1>
    %66 = vector.broadcast %65 : vector<1x256xi1> to vector<8x256xi1>
    %67 = vector.broadcast %cst_15 : f32 to vector<8x256xf32>
    %68 = arith.select %66, %64, %67 : vector<8x256xi1>, vector<8x256xf32>
    %c241_i32 = arith.constant 241 : i32
    %69 = tpu.dynamic_rotate %43 by %c241_i32 dim 1 : vector<8x256xf32>, i32 -> vector<8x256xf32>
    %cst_16 = arith.constant 0.000000e+00 : f32
    %70 = vector.shape_cast %40 : vector<1x256xi1> to vector<1x256xi1>
    %71 = vector.broadcast %70 : vector<1x256xi1> to vector<8x256xi1>
    %72 = vector.broadcast %cst_16 : f32 to vector<8x256xf32>
    %73 = arith.select %71, %69, %72 : vector<8x256xi1>, vector<8x256xf32>
    %c240_i32_17 = arith.constant 240 : i32
    %74 = tpu.dynamic_rotate %43 by %c240_i32_17 dim 1 : vector<8x256xf32>, i32 -> vector<8x256xf32>
    %cst_18 = arith.constant 0.000000e+00 : f32
    %75 = vector.shape_cast %37 : vector<1x256xi1> to vector<1x256xi1>
    %76 = vector.broadcast %75 : vector<1x256xi1> to vector<8x256xi1>
    %77 = vector.broadcast %cst_18 : f32 to vector<8x256xf32>
    %78 = arith.select %76, %74, %77 : vector<8x256xi1>, vector<8x256xf32>
    %c239_i32 = arith.constant 239 : i32
    %79 = tpu.dynamic_rotate %43 by %c239_i32 dim 1 : vector<8x256xf32>, i32 -> vector<8x256xf32>
    %cst_19 = arith.constant 0.000000e+00 : f32
    %80 = vector.shape_cast %41 : vector<1x256xi1> to vector<1x256xi1>
    %81 = vector.broadcast %80 : vector<1x256xi1> to vector<8x256xi1>
    %82 = vector.broadcast %cst_19 : f32 to vector<8x256xf32>
    %83 = arith.select %81, %79, %82 : vector<8x256xi1>, vector<8x256xf32>
    %84 = tpu.concatenate %48, %53 in 0 : vector<8x256xf32>, vector<8x256xf32> -> vector<16x256xf32>
    %85 = arith.truncf %84 : vector<16x256xf32> to vector<16x256xbf16>
    %c0_20 = arith.constant 0 : index
    %c0_21 = arith.constant 0 : index
    %86 = vector.load %arg6[%c0_20, %c0_21] : memref<80x512xbf16, #tpu.memory_space<vmem>>, vector<16x256xbf16>
    tpu.vector_store %arg6[%c0_20, %c0_21], %85 {strides = array<i32>} : memref<80x512xbf16, #tpu.memory_space<vmem>>, vector<16x256xbf16>,
    %87 = tpu.concatenate %58, %63 in 0 : vector<8x256xf32>, vector<8x256xf32> -> vector<16x256xf32>
    %88 = arith.truncf %87 : vector<16x256xf32> to vector<16x256xbf16>
    %c16 = arith.constant 16 : index
    %c0_22 = arith.constant 0 : index
    %89 = vector.load %arg6[%c16, %c0_22] : memref<80x512xbf16, #tpu.memory_space<vmem>>, vector<16x256xbf16>
    tpu.vector_store %arg6[%c16, %c0_22], %88 {strides = array<i32>} : memref<80x512xbf16, #tpu.memory_space<vmem>>, vector<16x256xbf16>,
    %90 = tpu.concatenate %43, %68 in 0 : vector<8x256xf32>, vector<8x256xf32> -> vector<16x256xf32>
    %91 = arith.truncf %90 : vector<16x256xf32> to vector<16x256xbf16>
    %c32 = arith.constant 32 : index
    %c0_23 = arith.constant 0 : index
    %92 = vector.load %arg6[%c32, %c0_23] : memref<80x512xbf16, #tpu.memory_space<vmem>>, vector<16x256xbf16>
    tpu.vector_store %arg6[%c32, %c0_23], %91 {strides = array<i32>} : memref<80x512xbf16, #tpu.memory_space<vmem>>, vector<16x256xbf16>,
    %93 = tpu.concatenate %73, %78 in 0 : vector<8x256xf32>, vector<8x256xf32> -> vector<16x256xf32>
    %94 = arith.truncf %93 : vector<16x256xf32> to vector<16x256xbf16>
    %c48 = arith.constant 48 : index
    %c0_24 = arith.constant 0 : index
    %95 = vector.load %arg6[%c48, %c0_24] : memref<80x512xbf16, #tpu.memory_space<vmem>>, vector<16x256xbf16>
    tpu.vector_store %arg6[%c48, %c0_24], %94 {strides = array<i32>} : memref<80x512xbf16, #tpu.memory_space<vmem>>, vector<16x256xbf16>,
    %cst_25 = arith.constant 0.000000e+00 : f32
    %96 = vector.broadcast %cst_25 : f32 to vector<8x256xf32>
    %97 = tpu.concatenate %83, %96 in 0 : vector<8x256xf32>, vector<8x256xf32> -> vector<16x256xf32>
    %98 = arith.truncf %97 : vector<16x256xf32> to vector<16x256xbf16>
    %c64 = arith.constant 64 : index
    %c0_26 = arith.constant 0 : index
    %99 = vector.load %arg6[%c64, %c0_26] : memref<80x512xbf16, #tpu.memory_space<vmem>>, vector<16x256xbf16>
    tpu.vector_store %arg6[%c64, %c0_26], %98 {strides = array<i32>} : memref<80x512xbf16, #tpu.memory_space<vmem>>, vector<16x256xbf16>,
    %100 = vector.extract_strided_slice %12 {offsets = [1, 0, 0], sizes = [1, 8, 256], strides = [1, 1, 1]} : vector<2x8x256xf32> to vector<1x8x256xf32>
    %101 = vector.shape_cast %100 : vector<1x8x256xf32> to vector<8x256xf32>
    %c17_i32_27 = arith.constant 17 : i32
    %102 = tpu.dynamic_rotate %101 by %c17_i32_27 dim 1 : vector<8x256xf32>, i32 -> vector<8x256xf32>
    %cst_28 = arith.constant 0.000000e+00 : f32
    %103 = vector.shape_cast %38 : vector<1x256xi1> to vector<1x256xi1>
    %104 = vector.broadcast %103 : vector<1x256xi1> to vector<8x256xi1>
    %105 = vector.broadcast %cst_28 : f32 to vector<8x256xf32>
    %106 = arith.select %104, %102, %105 : vector<8x256xi1>, vector<8x256xf32>
    %c16_i32_29 = arith.constant 16 : i32
    %107 = tpu.dynamic_rotate %101 by %c16_i32_29 dim 1 : vector<8x256xf32>, i32 -> vector<8x256xf32>
    %cst_30 = arith.constant 0.000000e+00 : f32
    %108 = vector.shape_cast %35 : vector<1x256xi1> to vector<1x256xi1>
    %109 = vector.broadcast %108 : vector<1x256xi1> to vector<8x256xi1>
    %110 = vector.broadcast %cst_30 : f32 to vector<8x256xf32>
    %111 = arith.select %109, %107, %110 : vector<8x256xi1>, vector<8x256xf32>
    %c15_i32_31 = arith.constant 15 : i32
    %112 = tpu.dynamic_rotate %101 by %c15_i32_31 dim 1 : vector<8x256xf32>, i32 -> vector<8x256xf32>
    %cst_32 = arith.constant 0.000000e+00 : f32
    %113 = vector.shape_cast %39 : vector<1x256xi1> to vector<1x256xi1>
    %114 = vector.broadcast %113 : vector<1x256xi1> to vector<8x256xi1>
    %115 = vector.broadcast %cst_32 : f32 to vector<8x256xf32>
    %116 = arith.select %114, %112, %115 : vector<8x256xi1>, vector<8x256xf32>
    %c1_i32_33 = arith.constant 1 : i32
    %117 = tpu.dynamic_rotate %101 by %c1_i32_33 dim 1 : vector<8x256xf32>, i32 -> vector<8x256xf32>
    %cst_34 = arith.constant 0.000000e+00 : f32
    %118 = vector.shape_cast %31 : vector<1x256xi1> to vector<1x256xi1>
    %119 = vector.broadcast %118 : vector<1x256xi1> to vector<8x256xi1>
    %120 = vector.broadcast %cst_34 : f32 to vector<8x256xf32>
    %121 = arith.select %119, %117, %120 : vector<8x256xi1>, vector<8x256xf32>
    %c255_i32_35 = arith.constant 255 : i32
    %122 = tpu.dynamic_rotate %101 by %c255_i32_35 dim 1 : vector<8x256xf32>, i32 -> vector<8x256xf32>
    %cst_36 = arith.constant 0.000000e+00 : f32
    %123 = vector.shape_cast %33 : vector<1x256xi1> to vector<1x256xi1>
    %124 = vector.broadcast %123 : vector<1x256xi1> to vector<8x256xi1>
    %125 = vector.broadcast %cst_36 : f32 to vector<8x256xf32>
    %126 = arith.select %124, %122, %125 : vector<8x256xi1>, vector<8x256xf32>
    %c241_i32_37 = arith.constant 241 : i32
    %127 = tpu.dynamic_rotate %101 by %c241_i32_37 dim 1 : vector<8x256xf32>, i32 -> vector<8x256xf32>
    %cst_38 = arith.constant 0.000000e+00 : f32
    %128 = vector.shape_cast %40 : vector<1x256xi1> to vector<1x256xi1>
    %129 = vector.broadcast %128 : vector<1x256xi1> to vector<8x256xi1>
    %130 = vector.broadcast %cst_38 : f32 to vector<8x256xf32>
    %131 = arith.select %129, %127, %130 : vector<8x256xi1>, vector<8x256xf32>
    %c240_i32_39 = arith.constant 240 : i32
    %132 = tpu.dynamic_rotate %101 by %c240_i32_39 dim 1 : vector<8x256xf32>, i32 -> vector<8x256xf32>
    %cst_40 = arith.constant 0.000000e+00 : f32
    %133 = vector.shape_cast %37 : vector<1x256xi1> to vector<1x256xi1>
    %134 = vector.broadcast %133 : vector<1x256xi1> to vector<8x256xi1>
    %135 = vector.broadcast %cst_40 : f32 to vector<8x256xf32>
    %136 = arith.select %134, %132, %135 : vector<8x256xi1>, vector<8x256xf32>
    %c239_i32_41 = arith.constant 239 : i32
    %137 = tpu.dynamic_rotate %101 by %c239_i32_41 dim 1 : vector<8x256xf32>, i32 -> vector<8x256xf32>
    %cst_42 = arith.constant 0.000000e+00 : f32
    %138 = vector.shape_cast %41 : vector<1x256xi1> to vector<1x256xi1>
    %139 = vector.broadcast %138 : vector<1x256xi1> to vector<8x256xi1>
    %140 = vector.broadcast %cst_42 : f32 to vector<8x256xf32>
    %141 = arith.select %139, %137, %140 : vector<8x256xi1>, vector<8x256xf32>
    %142 = tpu.concatenate %106, %111 in 0 : vector<8x256xf32>, vector<8x256xf32> -> vector<16x256xf32>
    %143 = arith.truncf %142 : vector<16x256xf32> to vector<16x256xbf16>
    %c0_43 = arith.constant 0 : index
    %c256 = arith.constant 256 : index
    %144 = vector.load %arg6[%c0_43, %c256] : memref<80x512xbf16, #tpu.memory_space<vmem>>, vector<16x256xbf16>
    tpu.vector_store %arg6[%c0_43, %c256], %143 {strides = array<i32>} : memref<80x512xbf16, #tpu.memory_space<vmem>>, vector<16x256xbf16>,
    %145 = tpu.concatenate %116, %121 in 0 : vector<8x256xf32>, vector<8x256xf32> -> vector<16x256xf32>
    %146 = arith.truncf %145 : vector<16x256xf32> to vector<16x256xbf16>
    %c16_44 = arith.constant 16 : index
    %c256_45 = arith.constant 256 : index
    %147 = vector.load %arg6[%c16_44, %c256_45] : memref<80x512xbf16, #tpu.memory_space<vmem>>, vector<16x256xbf16>
    tpu.vector_store %arg6[%c16_44, %c256_45], %146 {strides = array<i32>} : memref<80x512xbf16, #tpu.memory_space<vmem>>, vector<16x256xbf16>,
    %148 = tpu.concatenate %101, %126 in 0 : vector<8x256xf32>, vector<8x256xf32> -> vector<16x256xf32>
    %149 = arith.truncf %148 : vector<16x256xf32> to vector<16x256xbf16>
    %c32_46 = arith.constant 32 : index
    %c256_47 = arith.constant 256 : index
    %150 = vector.load %arg6[%c32_46, %c256_47] : memref<80x512xbf16, #tpu.memory_space<vmem>>, vector<16x256xbf16>
    tpu.vector_store %arg6[%c32_46, %c256_47], %149 {strides = array<i32>} : memref<80x512xbf16, #tpu.memory_space<vmem>>, vector<16x256xbf16>,
    %151 = tpu.concatenate %131, %136 in 0 : vector<8x256xf32>, vector<8x256xf32> -> vector<16x256xf32>
    %152 = arith.truncf %151 : vector<16x256xf32> to vector<16x256xbf16>
    %c48_48 = arith.constant 48 : index
    %c256_49 = arith.constant 256 : index
    %153 = vector.load %arg6[%c48_48, %c256_49] : memref<80x512xbf16, #tpu.memory_space<vmem>>, vector<16x256xbf16>
    tpu.vector_store %arg6[%c48_48, %c256_49], %152 {strides = array<i32>} : memref<80x512xbf16, #tpu.memory_space<vmem>>, vector<16x256xbf16>,
    %cst_50 = arith.constant 0.000000e+00 : f32
    %154 = vector.broadcast %cst_50 : f32 to vector<8x256xf32>
    %155 = tpu.concatenate %141, %154 in 0 : vector<8x256xf32>, vector<8x256xf32> -> vector<16x256xf32>
    %156 = arith.truncf %155 : vector<16x256xf32> to vector<16x256xbf16>
    %c64_51 = arith.constant 64 : index
    %c256_52 = arith.constant 256 : index
    %157 = vector.load %arg6[%c64_51, %c256_52] : memref<80x512xbf16, #tpu.memory_space<vmem>>, vector<16x256xbf16>
    tpu.vector_store %arg6[%c64_51, %c256_52], %156 {strides = array<i32>} : memref<80x512xbf16, #tpu.memory_space<vmem>>, vector<16x256xbf16>,
    %c0_53 = arith.constant 0 : index
    %c0_54 = arith.constant 0 : index
    %158 = vector.load %arg3[%c0_53, %c0_54] : memref<8x80xbf16, #tpu.memory_space<vmem>>, vector<8x80xbf16>
    %c0_55 = arith.constant 0 : index
    %c0_56 = arith.constant 0 : index
    %159 = vector.load %arg6[%c0_55, %c0_56] : memref<80x512xbf16, #tpu.memory_space<vmem>>, vector<80x512xbf16>
    %cst_57 = arith.constant dense<0.000000e+00> : vector<8x512xf32>
    %160 = tpu.matmul %158, %159, %cst_57 {dimension_numbers = #tpu.dot_dimension_numbers<[1], [0], [0], [1], [0, 0, 1, 1], [], []>} : vector<8x80xbf16>, vector<80x512xbf16>, vector<8x512xf32> -> vector<8x512xf32>
    %c0_i32_58 = arith.constant 0 : i32
    %161 = arith.cmpi eq, %arg0, %c0_i32_58 : i32
    %162 = arith.extui %161 : i1 to i32
    %c0_i32_59 = arith.constant 0 : i32
    %163 = arith.cmpi ne, %162, %c0_i32_59 : i32
    scf.if %163 {
      %cst_71 = arith.constant 0.000000e+00 : f32
      %181 = vector.broadcast %cst_71 : f32 to vector<8x2xf32>
      %c0_72 = arith.constant 0 : index
      %c0_73 = arith.constant 0 : index
      %182 = vector.load %arg5[%c0_72, %c0_73] : memref<8x2xf32, #tpu.memory_space<vmem>>, vector<8x2xf32>
      tpu.vector_store %arg5[%c0_72, %c0_73], %181 {strides = array<i32>} : memref<8x2xf32, #tpu.memory_space<vmem>>, vector<8x2xf32>,
    } else {
    }
    %c0_60 = arith.constant 0 : index
    %c0_61 = arith.constant 0 : index
    %164 = vector.load %arg5[%c0_60, %c0_61] : memref<8x2xf32, #tpu.memory_space<vmem>>, vector<8x2xf32>
    %cst_62 = arith.constant dense<0.000000e+00> : vector<8xf32>
    %165 = vector.multi_reduction <add>, %160, %cst_62 [1] : vector<8x512xf32> to vector<8xf32>
    %166 = vector.shape_cast %165 : vector<8xf32> to vector<8x1xf32>
    %167 = arith.mulf %160, %160 : vector<8x512xf32>
    %cst_63 = arith.constant dense<0.000000e+00> : vector<8xf32>
    %168 = vector.multi_reduction <add>, %167, %cst_63 [1] : vector<8x512xf32> to vector<8xf32>
    %169 = vector.shape_cast %168 : vector<8xf32> to vector<8x1xf32>
    %170 = tpu.concatenate %166, %169 in 1 : vector<8x1xf32>, vector<8x1xf32> -> vector<8x2xf32>
    %171 = arith.addf %164, %170 : vector<8x2xf32>
    %c0_64 = arith.constant 0 : index
    %c0_65 = arith.constant 0 : index
    %172 = vector.load %arg5[%c0_64, %c0_65] : memref<8x2xf32, #tpu.memory_space<vmem>>, vector<8x2xf32>
    tpu.vector_store %arg5[%c0_64, %c0_65], %171 {strides = array<i32>} : memref<8x2xf32, #tpu.memory_space<vmem>>, vector<8x2xf32>,
    %173 = vector.extract_strided_slice %160 {offsets = [0, 0], sizes = [8, 256], strides = [1, 1]} : vector<8x512xf32> to vector<8x256xf32>
    %c0_66 = arith.constant 0 : index
    %c0_67 = arith.constant 0 : index
    %c0_68 = arith.constant 0 : index
    %174 = vector.load %arg4[%c0_66, %c0_67, %c0_68] : memref<2x8x256xf32, #tpu.memory_space<vmem>>, vector<1x8x256xf32>
    %175 = vector.shape_cast %174 : vector<1x8x256xf32> to vector<8x256xf32>
    %176 = vector.shape_cast %173 : vector<8x256xf32> to vector<1x8x256xf32>
    tpu.vector_store %arg4[%c0_66, %c0_67, %c0_68], %176 {strides = array<i32>} : memref<2x8x256xf32, #tpu.memory_space<vmem>>, vector<1x8x256xf32>,
    %177 = vector.extract_strided_slice %160 {offsets = [0, 256], sizes = [8, 256], strides = [1, 1]} : vector<8x512xf32> to vector<8x256xf32>
    %c1 = arith.constant 1 : index
    %c0_69 = arith.constant 0 : index
    %c0_70 = arith.constant 0 : index
    %178 = vector.load %arg4[%c1, %c0_69, %c0_70] : memref<2x8x256xf32, #tpu.memory_space<vmem>>, vector<1x8x256xf32>
    %179 = vector.shape_cast %178 : vector<1x8x256xf32> to vector<8x256xf32>
    %180 = vector.shape_cast %177 : vector<8x256xf32> to vector<1x8x256xf32>
    tpu.vector_store %arg4[%c1, %c0_69, %c0_70], %180 {strides = array<i32>} : memref<2x8x256xf32, #tpu.memory_space<vmem>>, vector<1x8x256xf32>,
    return
  }
  func.func @transform_0(%arg0: i32) -> (i32, i32, i32) {
    %c0_i32 = arith.constant 0 : i32
    %c0_i32_0 = arith.constant 0 : i32
    %c0_i32_1 = arith.constant 0 : i32
    return %arg0, %c0_i32, %c0_i32_0 : i32, i32, i32
  }
  func.func @transform_1(%arg0: i32) -> (i32, i32) {
    %c0_i32 = arith.constant 0 : i32
    %c0_i32_0 = arith.constant 0 : i32
    %c0_i32_1 = arith.constant 0 : i32
    return %c0_i32, %c0_i32_0 : i32, i32
  }
  func.func @transform_2(%arg0: i32) -> (i32, i32) {
    %c0_i32 = arith.constant 0 : i32
    %c0_i32_0 = arith.constant 0 : i32
    %c0_i32_1 = arith.constant 0 : i32
    return %c0_i32, %c0_i32_0 : i32, i32
  }
  func.func @transform_3(%arg0: i32) -> (i32, i32, i32) {
    %c0_i32 = arith.constant 0 : i32
    %c0_i32_0 = arith.constant 0 : i32
    %c0_i32_1 = arith.constant 0 : i32
    return %arg0, %c0_i32, %c0_i32_0 : i32, i32, i32
  }
  func.func @transform_4(%arg0: i32) -> (i32, i32) {
    %c0_i32 = arith.constant 0 : i32
    %c0_i32_0 = arith.constant 0 : i32
    %c0_i32_1 = arith.constant 0 : i32
    return %c0_i32, %c0_i32_0 : i32, i32
  }
}

</mosaic_0001>

<llo_original>
// kernel: basic_block.5
$region0: #{basic_block.5}
  #allocation0 [shape = 'u32[]', space=smem, size = 0x4, offset = 0x4, fixed_abs, tag = 'smem constant byte address 0x4 - core index']
  #allocation1 [shape = 'u32[72,128]{1,0:T(1,128)}', space=vmem, size = 0x9000, scoped, tag = 'internal scratch']
  %s0 = inlined_call_operand.vmem [shape: f32[2,8,256], index: 0, kind: input, shape index: {}]
  %s1 = inlined_call_operand.vmem [shape: f32[2,8,256], index: 1, kind: input, shape index: {}]
  %s2 = inlined_call_operand.vmem [shape: f32[8,2], index: 2, kind: input, shape index: {}]
  %s3 = inlined_call_operand.vmem [shape: f32[2,8,256], index: 3, kind: output, shape index: {}]
  %s4 = sld [smem:[#allocation0]]
  $region22: #{basic_block.5} parent=0
    _
  %s6 = ssub.s32 1, %s4
  %s7 = scalar_select 0, %s6, %s4
  // Predicated region
  $region2: #{basic_block.5} parent=0 // pred_check
    _
  $region3: #{basic_block.5} parent=0 // pred_check_branch
    %9 = sbr.rel (0) target = $region5
  $region4: #{basic_block.5} parent=0 // pred_region
    _
  $region5: #{basic_block.5} parent=0 // pred_fallthru
    _
  // Predicated region
  $region6: #{basic_block.5} parent=0 // pred_check
    _
  $region7: #{basic_block.5} parent=0 // pred_check_branch
    %11 = sbr.rel (0) target = $region9
  $region8: #{basic_block.5} parent=0 // pred_region
    _
  $region9: #{basic_block.5} parent=0 // pred_fallthru
    _
  // Predicated region
  $region10: #{basic_block.5} parent=0 // pred_check
    _
  $region11: #{basic_block.5} parent=0 // pred_check_branch
    %13 = sbr.rel (0) target = $region13
  $region12: #{basic_block.5} parent=0 // pred_region
    _
  $region13: #{basic_block.5} parent=0 // pred_fallthru
    _
  %v14 = vld [vmem:[%s2] sm:$0xff]
  %v15 = vld [vmem:[%s0] sm:$0xff]
  %v16 = vld [vmem:[%s0 + $0x8] sm:$0xff]
  %v17 = vld [vmem:[%s0 + $0x10] sm:$0xff]
  %v18 = vld [vmem:[%s0 + $0x18] sm:$0xff]
  %20 = vset.pattern.permute.xlu0 0
  %21 = vperm.xlu0 %20, %v14
  %v22 = vpop.permute.xlu0 %21
  %v24 = vmul.f32 %v15, %v22
  %v25 = vmul.f32 %v16, %v22
  %v26 = vmul.f32 %v17, %v22
  %v27 = vmul.f32 %v18, %v22
  %28 = vset.pattern.permute.xlu0 1
  %29 = vperm.xlu0 %28, %v14
  %v30 = vpop.permute.xlu0 %29
  %v32 = vadd.f32 %v24, %v30
  %v33 = vadd.f32 %v25, %v30
  %v34 = vadd.f32 %v26, %v30
  %v35 = vadd.f32 %v27, %v30
  %v36 = vld [vmem:[%s1] sm:$0xff]
  %v37 = vld [vmem:[%s1 + $0x8] sm:$0xff]
  %v38 = vld [vmem:[%s1 + $0x10] sm:$0xff]
  %v39 = vld [vmem:[%s1 + $0x18] sm:$0xff]
  %v40 = vadd.f32 %v32, %v36
  %v41 = vadd.f32 %v33, %v37
  %v42 = vadd.f32 %v34, %v38
  %v43 = vadd.f32 %v35, %v39
  %v44 = vmax.f32 %v40, 0.0
  %v45 = vmax.f32 %v41, 0.0
  %v46 = vmax.f32 %v42, 0.0
  %v47 = vmax.f32 %v43, 0.0
  %48 = vst [vmem:[%s3] sm:$0xff] %v44
  %49 = vst [vmem:[%s3 + $0x8] sm:$0xff] %v45
  %50 = vst [vmem:[%s3 + $0x10] sm:$0xff] %v46
  %51 = vst [vmem:[%s3 + $0x18] sm:$0xff] %v47
  // Predicated region
  $region14: #{basic_block.5} parent=0 // pred_check
    _
  $region15: #{basic_block.5} parent=0 // pred_check_branch
    %53 = sbr.rel (0) target = $region17
  $region16: #{basic_block.5} parent=0 // pred_region
    _
  $region17: #{basic_block.5} parent=0 // pred_fallthru
    _
  // Predicated region
  $region18: #{basic_block.5} parent=0 // pred_check
    _
  $region19: #{basic_block.5} parent=0 // pred_check_branch
    %55 = sbr.rel (0) target = $region21
  $region20: #{basic_block.5} parent=0 // pred_region
    _
  $region21: #{basic_block.5} parent=0 // pred_fallthru
    _

// kernel: basic_block.4
$region0: #{basic_block.4}
  #allocation0 [shape = 'u32[]', space=smem, size = 0x4, offset = 0x4, fixed_abs, tag = 'smem constant byte address 0x4 - core index']
  #allocation1 [shape = 'u32[72,128]{1,0:T(1,128)}', space=vmem, size = 0x9000, scoped, tag = 'internal scratch']
  #allocation2 [shape = 'bf16[80,512]{1,0:T(8,128)(2,1)}', space=vmem, size = 0x14000, scoped, tag = 'scratch operand']
  %s0 = inlined_call_operand.vmem [shape: bf16[2,8,256], index: 0, kind: input, shape index: {}]
  %s1 = inlined_call_operand.vmem [shape: f32[8,2], index: 1, kind: input, shape index: {}]
  %s2 = inlined_call_operand.vmem [shape: bf16[8,80], index: 2, kind: input, shape index: {}]
  %s3 = inlined_call_operand.vmem [shape: f32[2,8,256], index: 3, kind: output, shape index: {0}]
  %s4 = inlined_call_operand.vmem [shape: f32[8,2], index: 4, kind: output, shape index: {1}]
  %5 = xla_tuple %s3, %s4
  %s6 = sld [smem:[#allocation0]]
  $region34: #{basic_block.4} parent=0
    _
  %s8 = ssub.s32 1, %s6
  %s9 = scalar_select 0, %s8, %s6
  // Predicated region
  $region2: #{basic_block.4} parent=0 // pred_check
    _
  $region3: #{basic_block.4} parent=0 // pred_check_branch
    %11 = sbr.rel (0) target = $region5
  $region4: #{basic_block.4} parent=0 // pred_region
    _
  $region5: #{basic_block.4} parent=0 // pred_fallthru
    _
  // Predicated region
  $region6: #{basic_block.4} parent=0 // pred_check
    _
  $region7: #{basic_block.4} parent=0 // pred_check_branch
    %13 = sbr.rel (0) target = $region9
  $region8: #{basic_block.4} parent=0 // pred_region
    _
  $region9: #{basic_block.4} parent=0 // pred_fallthru
    _
  // Predicated region
  $region10: #{basic_block.4} parent=0 // pred_check
    _
  $region11: #{basic_block.4} parent=0 // pred_check_branch
    %15 = sbr.rel (0) target = $region13
  $region12: #{basic_block.4} parent=0 // pred_region
    _
  $region13: #{basic_block.4} parent=0 // pred_fallthru
    _
  %v17 = vld [vmem:[%s1] sm:$0xff]
  %v18 = vld [vmem:[%s0] sm:$0xff]
  %v19 = vld [vmem:[%s0 + $0x8] sm:$0xff]
  %v20 = vunpack.c.l.bf16 %v18
  %v21 = vunpack.c.h.bf16 %v18
  %v22 = vunpack.c.l.bf16 %v19
  %v23 = vunpack.c.h.bf16 %v19
  %25 = vset.pattern.permute.xlu0 0
  %26 = vperm.xlu0 %25, %v17
  %v27 = vpop.permute.xlu0 %26
  %v29 = vmul.f32 %v20, %v27
  %v30 = vmul.f32 %v21, %v27
  %v31 = vmul.f32 %v22, %v27
  %v32 = vmul.f32 %v23, %v27
  %33 = vset.pattern.permute.xlu0 1
  %34 = vperm.xlu0 %33, %v17
  %v35 = vpop.permute.xlu0 %34
  %v37 = vadd.f32 %v29, %v35
  %v38 = vadd.f32 %v30, %v35
  %v39 = vadd.f32 %v31, %v35
  %v40 = vadd.f32 %v32, %v35
  %v41 = vmax.f32 %v37, 0.0
  %v42 = vmax.f32 %v38, 0.0
  %v43 = vmax.f32 %v39, 0.0
  %v44 = vmax.f32 %v40, 0.0
  %v45 = vlaneseq
  %v46 = vand.u32 %v45, 127
  %v47 = vadd.s32 %v46, 128
  %vm48 = vcmp.lt.s32.totalorder %v46, 0
  %v49 = vsub.s32 0, %v46
  %v50 = vsel %vm48, %v49, %v46
  %v51 = vshrl.u32 %v50, 4
  %v52 = vand.u32 %v50, 15
  %v53 = vsub.s32 0, %v52
  %v54 = vsel %vm48, %v53, %v52
  %vm55 = vcmp.lt.s32.totalorder %v47, 0
  %v56 = vsub.s32 0, %v47
  %v57 = vsel %vm55, %v56, %v47
  %v58 = vshrl.u32 %v57, 4
  %v59 = vand.u32 %v57, 15
  %v60 = vsub.s32 0, %v59
  %v61 = vsel %vm55, %v60, %v59
  %vm62 = vcmp.ne.s32.totalorder %v54, 0
  %vm63 = vcmp.ne.s32.totalorder %v61, 0
  %vm64 = vcmp.lt.s32.totalorder %v54, 0
  %vm65 = vcmp.lt.s32.totalorder %v61, 0
  %vm66 = vmand %vm64, %vm62
  %vm67 = vmand %vm65, %vm63
  %v68 = vadd.s32 %v54, 16
  %v69 = vadd.s32 %v61, 16
  %v70 = vsel %vm66, %v68, %v54
  %v71 = vsel %vm67, %v69, %v61
  %vm72 = vcmp.ge.s32.totalorder %v70, 1
  %vm73 = vcmp.ge.s32.totalorder %v71, 1
  %vm74 = vcmp.le.s32.totalorder %v70, 14
  %vm75 = vcmp.le.s32.totalorder %v71, 14
  %vm76 = vcmp.ge.s32.totalorder %v46, 16
  %vm77 = vcmp.ge.s32.totalorder %v47, 16
  %vm78 = vcmp.lt.s32.totalorder %v46, 240
  %vm79 = vcmp.lt.s32.totalorder %v47, 240
  %vm80 = vmand %vm76, %vm72
  %vm81 = vmand %vm77, %vm73
  %vm82 = vmand %vm76, %vm74
  %vm83 = vmand %vm77, %vm75
  %vm84 = vmand %vm78, %vm72
  %vm85 = vmand %vm79, %vm73
  %vm86 = vmand %vm78, %vm74
  %vm87 = vmand %vm79, %vm75
  %88 = vrot.lane.b32.xlu0 %v41, 17
  %v89 = vpop.permute.xlu0 %88
  %90 = vrot.lane.b32.xlu0 %v42, 17
  %v91 = vpop.permute.xlu0 %90
  %vm92 = vcmp.lt.s32.totalorder %v46, 17
  %v93 = vsel %vm92, %v89, %v91
  %v94 = vsel %vm92, %v91, %v89
  %v95 = vsel %vm80, 1, 0
  %v96 = vsel %vm81, 1, 0
  %vm97 = vcmp.eq.s32.totalorder %v95, 1
  %vm98 = vcmp.eq.s32.totalorder %v96, 1
  %v99 = vsel %vm97, %v94, 0.0
  %v100 = vsel %vm98, %v93, 0.0
  %101 = vrot.lane.b32.xlu0 %v41, 16
  %v102 = vpop.permute.xlu0 %101
  %103 = vrot.lane.b32.xlu0 %v42, 16
  %v104 = vpop.permute.xlu0 %103
  %vm105 = vcmp.lt.s32.totalorder %v46, 16
  %v106 = vsel %vm105, %v102, %v104
  %v107 = vsel %vm105, %v104, %v102
  %v108 = vsel %vm76, 1, 0
  %v109 = vsel %vm77, 1, 0
  %vm110 = vcmp.eq.s32.totalorder %v108, 1
  %vm111 = vcmp.eq.s32.totalorder %v109, 1
  %v112 = vsel %vm110, %v107, 0.0
  %v113 = vsel %vm111, %v106, 0.0
  %114 = vrot.lane.b32.xlu0 %v41, 15
  %v115 = vpop.permute.xlu0 %114
  %116 = vrot.lane.b32.xlu0 %v42, 15
  %v117 = vpop.permute.xlu0 %116
  %vm118 = vcmp.lt.s32.totalorder %v46, 15
  %v119 = vsel %vm118, %v115, %v117
  %v120 = vsel %vm118, %v117, %v115
  %v121 = vsel %vm82, 1, 0
  %v122 = vsel %vm83, 1, 0
  %vm123 = vcmp.eq.s32.totalorder %v121, 1
  %vm124 = vcmp.eq.s32.totalorder %v122, 1
  %v125 = vsel %vm123, %v120, 0.0
  %v126 = vsel %vm124, %v119, 0.0
  %127 = vrot.lane.b32.xlu0 %v41, 1
  %v128 = vpop.permute.xlu0 %127
  %129 = vrot.lane.b32.xlu0 %v42, 1
  %v130 = vpop.permute.xlu0 %129
  %vm131 = vcmp.lt.s32.totalorder %v46, 1
  %v132 = vsel %vm131, %v128, %v130
  %v133 = vsel %vm131, %v130, %v128
  %v134 = vsel %vm72, 1, 0
  %v135 = vsel %vm73, 1, 0
  %vm136 = vcmp.eq.s32.totalorder %v134, 1
  %vm137 = vcmp.eq.s32.totalorder %v135, 1
  %v138 = vsel %vm136, %v133, 0.0
  %v139 = vsel %vm137, %v132, 0.0
  %140 = vrot.lane.b32.xlu0 %v41, 127
  %v141 = vpop.permute.xlu0 %140
  %142 = vrot.lane.b32.xlu0 %v42, 127
  %v143 = vpop.permute.xlu0 %142
  %vm144 = vcmp.lt.s32.totalorder %v46, 127
  %v145 = vsel %vm144, %v141, %v143
  %v146 = vsel %vm144, %v143, %v141
  %v147 = vsel %vm74, 1, 0
  %v148 = vsel %vm75, 1, 0
  %vm149 = vcmp.eq.s32.totalorder %v147, 1
  %vm150 = vcmp.eq.s32.totalorder %v148, 1
  %v151 = vsel %vm149, %v145, 0.0
  %v152 = vsel %vm150, %v146, 0.0
  %153 = vrot.lane.b32.xlu0 %v41, 113
  %v154 = vpop.permute.xlu0 %153
  %155 = vrot.lane.b32.xlu0 %v42, 113
  %v156 = vpop.permute.xlu0 %155
  %vm157 = vcmp.lt.s32.totalorder %v46, 113
  %v158 = vsel %vm157, %v154, %v156
  %v159 = vsel %vm157, %v156, %v154
  %v160 = vsel %vm84, 1, 0
  %v161 = vsel %vm85, 1, 0
  %vm162 = vcmp.eq.s32.totalorder %v160, 1
  %vm163 = vcmp.eq.s32.totalorder %v161, 1
  %v164 = vsel %vm162, %v158, 0.0
  %v165 = vsel %vm163, %v159, 0.0
  %166 = vrot.lane.b32.xlu0 %v41, 112
  %v167 = vpop.permute.xlu0 %166
  %168 = vrot.lane.b32.xlu0 %v42, 112
  %v169 = vpop.permute.xlu0 %168
  %vm170 = vcmp.lt.s32.totalorder %v46, 112
  %v171 = vsel %vm170, %v167, %v169
  %v172 = vsel %vm170, %v169, %v167
  %v173 = vsel %vm78, 1, 0
  %v174 = vsel %vm79, 1, 0
  %vm175 = vcmp.eq.s32.totalorder %v173, 1
  %vm176 = vcmp.eq.s32.totalorder %v174, 1
  %v177 = vsel %vm175, %v171, 0.0
  %v178 = vsel %vm176, %v172, 0.0
  %179 = vrot.lane.b32.xlu0 %v41, 111
  %v180 = vpop.permute.xlu0 %179
  %181 = vrot.lane.b32.xlu0 %v42, 111
  %v182 = vpop.permute.xlu0 %181
  %vm183 = vcmp.lt.s32.totalorder %v46, 111
  %v184 = vsel %vm183, %v180, %v182
  %v185 = vsel %vm183, %v182, %v180
  %v186 = vsel %vm86, 1, 0
  %v187 = vsel %vm87, 1, 0
  %vm188 = vcmp.eq.s32.totalorder %v186, 1
  %vm189 = vcmp.eq.s32.totalorder %v187, 1
  %v190 = vsel %vm188, %v184, 0.0
  %v191 = vsel %vm189, %v185, 0.0
  %v192 = vpack.c.bf16 %v100, %v99
  %v193 = vpack.c.bf16 %v113, %v112
  %194 = vst [vmem:[#allocation2] sm:$0xff] %v192
  %195 = vst [vmem:[#allocation2 + $0x10] sm:$0xff] %v193
  %v196 = vpack.c.bf16 %v126, %v125
  %v197 = vpack.c.bf16 %v139, %v138
  %198 = vst [vmem:[#allocation2 + $0x20] sm:$0xff] %v196
  %199 = vst [vmem:[#allocation2 + $0x30] sm:$0xff] %v197
  %v200 = vpack.c.bf16 %v42, %v41
  %v201 = vpack.c.bf16 %v152, %v151
  %202 = vst [vmem:[#allocation2 + $0x40] sm:$0xff] %v200
  %203 = vst [vmem:[#allocation2 + $0x50] sm:$0xff] %v201
  %v204 = vpack.c.bf16 %v165, %v164
  %v205 = vpack.c.bf16 %v178, %v177
  %206 = vst [vmem:[#allocation2 + $0x60] sm:$0xff] %v204
  %207 = vst [vmem:[#allocation2 + $0x70] sm:$0xff] %v205
  %v208 = vpack.c.bf16 %v191, %v190
  %v209 = vpack.c.bf16 0.0, 0.0
  %210 = vst [vmem:[#allocation2 + $0x80] sm:$0xff] %v208
  %211 = vst [vmem:[#allocation2 + $0x90] sm:$0xff] %v209
  %212 = vrot.lane.b32.xlu0 %v43, 17
  %v213 = vpop.permute.xlu0 %212
  %214 = vrot.lane.b32.xlu0 %v44, 17
  %v215 = vpop.permute.xlu0 %214
  %v216 = vsel %vm92, %v213, %v215
  %v217 = vsel %vm92, %v215, %v213
  %v218 = vsel %vm97, %v217, 0.0
  %v219 = vsel %vm98, %v216, 0.0
  %220 = vrot.lane.b32.xlu0 %v43, 16
  %v221 = vpop.permute.xlu0 %220
  %222 = vrot.lane.b32.xlu0 %v44, 16
  %v223 = vpop.permute.xlu0 %222
  %v224 = vsel %vm105, %v221, %v223
  %v225 = vsel %vm105, %v223, %v221
  %v226 = vsel %vm110, %v225, 0.0
  %v227 = vsel %vm111, %v224, 0.0
  %228 = vrot.lane.b32.xlu0 %v43, 15
  %v229 = vpop.permute.xlu0 %228
  %230 = vrot.lane.b32.xlu0 %v44, 15
  %v231 = vpop.permute.xlu0 %230
  %v232 = vsel %vm118, %v229, %v231
  %v233 = vsel %vm118, %v231, %v229
  %v234 = vsel %vm123, %v233, 0.0
  %v235 = vsel %vm124, %v232, 0.0
  %236 = vrot.lane.b32.xlu0 %v43, 1
  %v237 = vpop.permute.xlu0 %236
  %238 = vrot.lane.b32.xlu0 %v44, 1
  %v239 = vpop.permute.xlu0 %238
  %v240 = vsel %vm131, %v237, %v239
  %v241 = vsel %vm131, %v239, %v237
  %v242 = vsel %vm136, %v241, 0.0
  %v243 = vsel %vm137, %v240, 0.0
  %244 = vrot.lane.b32.xlu0 %v43, 127
  %v245 = vpop.permute.xlu0 %244
  %246 = vrot.lane.b32.xlu0 %v44, 127
  %v247 = vpop.permute.xlu0 %246
  %v248 = vsel %vm144, %v245, %v247
  %v249 = vsel %vm144, %v247, %v245
  %v250 = vsel %vm149, %v248, 0.0
  %v251 = vsel %vm150, %v249, 0.0
  %252 = vrot.lane.b32.xlu0 %v43, 113
  %v253 = vpop.permute.xlu0 %252
  %254 = vrot.lane.b32.xlu0 %v44, 113
  %v255 = vpop.permute.xlu0 %254
  %v256 = vsel %vm157, %v253, %v255
  %v257 = vsel %vm157, %v255, %v253
  %v258 = vsel %vm162, %v256, 0.0
  %v259 = vsel %vm163, %v257, 0.0
  %260 = vrot.lane.b32.xlu0 %v43, 112
  %v261 = vpop.permute.xlu0 %260
  %262 = vrot.lane.b32.xlu0 %v44, 112
  %v263 = vpop.permute.xlu0 %262
  %v264 = vsel %vm170, %v261, %v263
  %v265 = vsel %vm170, %v263, %v261
  %v266 = vsel %vm175, %v264, 0.0
  %v267 = vsel %vm176, %v265, 0.0
  %268 = vrot.lane.b32.xlu0 %v43, 111
  %v269 = vpop.permute.xlu0 %268
  %270 = vrot.lane.b32.xlu0 %v44, 111
  %v271 = vpop.permute.xlu0 %270
  %v272 = vsel %vm183, %v269, %v271
  %v273 = vsel %vm183, %v271, %v269
  %v274 = vsel %vm188, %v272, 0.0
  %v275 = vsel %vm189, %v273, 0.0
  %v276 = vpack.c.bf16 %v219, %v218
  %v277 = vpack.c.bf16 %v227, %v226
  %278 = vst [vmem:[#allocation2 + $0x8] sm:$0xff] %v276
  %279 = vst [vmem:[#allocation2 + $0x18] sm:$0xff] %v277
  %v280 = vpack.c.bf16 %v235, %v234
  %v281 = vpack.c.bf16 %v243, %v242
  %282 = vst [vmem:[#allocation2 + $0x28] sm:$0xff] %v280
  %283 = vst [vmem:[#allocation2 + $0x38] sm:$0xff] %v281
  %v284 = vpack.c.bf16 %v44, %v43
  %v285 = vpack.c.bf16 %v251, %v250
  %286 = vst [vmem:[#allocation2 + $0x48] sm:$0xff] %v284
  %287 = vst [vmem:[#allocation2 + $0x58] sm:$0xff] %v285
  %v288 = vpack.c.bf16 %v259, %v258
  %v289 = vpack.c.bf16 %v267, %v266
  %290 = vst [vmem:[#allocation2 + $0x68] sm:$0xff] %v288
  %291 = vst [vmem:[#allocation2 + $0x78] sm:$0xff] %v289
  %v292 = vpack.c.bf16 %v275, %v274
  %293 = vst [vmem:[#allocation2 + $0x88] sm:$0xff] %v292
  %294 = vst [vmem:[#allocation2 + $0x98] sm:$0xff] %v209
  %v295 = vld [vmem:[%s2] sm:$0xf]
  %v296 = vld [vmem:[#allocation2] sm:$0xff]
  %v297 = vld [vmem:[#allocation2 + $0x8] sm:$0xff]
  %v298 = vld [vmem:[#allocation2 + $0x10] sm:$0xff]
  %v299 = vld [vmem:[#allocation2 + $0x18] sm:$0xff]
  %v300 = vld [vmem:[#allocation2 + $0x20] sm:$0xff]
  %v301 = vld [vmem:[#allocation2 + $0x28] sm:$0xff]
  %v302 = vld [vmem:[#allocation2 + $0x30] sm:$0xff]
  %v303 = vld [vmem:[#allocation2 + $0x38] sm:$0xff]
  %v304 = vld [vmem:[#allocation2 + $0x40] sm:$0xff]
  %v305 = vld [vmem:[#allocation2 + $0x48] sm:$0xff]
  %v306 = vld [vmem:[#allocation2 + $0x50] sm:$0xff]
  %v307 = vld [vmem:[#allocation2 + $0x58] sm:$0xff]
  %v308 = vld [vmem:[#allocation2 + $0x60] sm:$0xff]
  %v309 = vld [vmem:[#allocation2 + $0x68] sm:$0xff]
  %v310 = vld [vmem:[#allocation2 + $0x70] sm:$0xff]
  %v311 = vld [vmem:[#allocation2 + $0x78] sm:$0xff]
  %v312 = vld [vmem:[#allocation2 + $0x80] sm:$0xff]
  %v313 = vld [vmem:[#allocation2 + $0x88] sm:$0xff]
  %v314 = vld [vmem:[#allocation2 + $0x90] sm:$0xff]
  %v315 = vld [vmem:[#allocation2 + $0x98] sm:$0xff]
  %v336 = vunpack.c.l.b16 %v296
  %v337 = vunpack.c.h.b16 %v296
  %v338 = vunpack.c.l.b16 %v297
  %v339 = vunpack.c.h.b16 %v297
  %v340 = vunpack.c.l.b16 %v298
  %v341 = vunpack.c.h.b16 %v298
  %v342 = vunpack.c.l.b16 %v299
  %v343 = vunpack.c.h.b16 %v299
  %v344 = vunpack.c.l.b16 %v300
  %v345 = vunpack.c.h.b16 %v300
  %v346 = vunpack.c.l.b16 %v301
  %v347 = vunpack.c.h.b16 %v301
  %v348 = vunpack.c.l.b16 %v302
  %v349 = vunpack.c.h.b16 %v302
  %v350 = vunpack.c.l.b16 %v303
  %v351 = vunpack.c.h.b16 %v303
  %v352 = vunpack.c.l.b16 %v304
  %v353 = vunpack.c.h.b16 %v304
  %v354 = vunpack.c.l.b16 %v305
  %v355 = vunpack.c.h.b16 %v305
  %v356 = vunpack.c.l.b16 %v306
  %v357 = vunpack.c.h.b16 %v306
  %v358 = vunpack.c.l.b16 %v307
  %v359 = vunpack.c.h.b16 %v307
  %v360 = vunpack.c.l.b16 %v308
  %v361 = vunpack.c.h.b16 %v308
  %v362 = vunpack.c.l.b16 %v309
  %v363 = vunpack.c.h.b16 %v309
  %v364 = vunpack.c.l.b16 %v310
  %v365 = vunpack.c.h.b16 %v310
  %v366 = vunpack.c.l.b16 %v311
  %v367 = vunpack.c.h.b16 %v311
  %v368 = vunpack.c.l.b16 %v312
  %v369 = vunpack.c.h.b16 %v312
  %v370 = vunpack.c.l.b16 %v313
  %v371 = vunpack.c.h.b16 %v313
  %v372 = vunpack.c.l.b16 %v314
  %v373 = vunpack.c.h.b16 %v314
  %v374 = vunpack.c.l.b16 %v315
  %v375 = vunpack.c.h.b16 %v315
  %v376 = vpack.c.b16 %v340, %v336
  %v377 = vpack.c.b16 %v341, %v337
  %v378 = vpack.c.b16 %v342, %v338
  %v379 = vpack.c.b16 %v343, %v339
  %v380 = vpack.c.b16 %v348, %v344
  %v381 = vpack.c.b16 %v349, %v345
  %v382 = vpack.c.b16 %v350, %v346
  %v383 = vpack.c.b16 %v351, %v347
  %v384 = vpack.c.b16 %v356, %v352
  %v385 = vpack.c.b16 %v357, %v353
  %v386 = vpack.c.b16 %v358, %v354
  %v387 = vpack.c.b16 %v359, %v355
  %v388 = vpack.c.b16 %v364, %v360
  %v389 = vpack.c.b16 %v365, %v361
  %v390 = vpack.c.b16 %v366, %v362
  %v391 = vpack.c.b16 %v367, %v363
  %v392 = vpack.c.b16 %v372, %v368
  %v393 = vpack.c.b16 %v373, %v369
  %v394 = vpack.c.b16 %v374, %v370
  %v395 = vpack.c.b16 %v375, %v371
  %vm416 = vcmask 654336
  %v418 = vsel %vm416, %v295, 0
  %420 = vmatpush.bf16.msra.mxu0 0
  %421 = vmatpush.bf16.msra.mxu0 0
  %422 = vmatpush.bf16.msra.mxu0 0
  %423 = vmatpush.bf16.msra.mxu0 %v392
  %424 = vmatpush.bf16.msra.mxu0 %v388
  %425 = vmatpush.bf16.msra.mxu0 %v384
  %426 = vmatpush.bf16.msra.mxu0 %v380
  %427 = vmatpush.bf16.msra.mxu0 %v376
  %428 = vmatmul.bf16.gmra.mxu0 %v418
  %v429 = vpop.f32.mrf.mxu0
  %v430 = vadd.f32 0.0, %v429
  %v431 = vpop.f32.mrf.mxu0
  %432 = vdwg.mxu0
  %433 = vmatpush.bf16.msra.mxu0 0
  %434 = vmatpush.bf16.msra.mxu0 0
  %435 = vmatpush.bf16.msra.mxu0 0
  %436 = vmatpush.bf16.msra.mxu0 %v393
  %437 = vmatpush.bf16.msra.mxu0 %v389
  %438 = vmatpush.bf16.msra.mxu0 %v385
  %439 = vmatpush.bf16.msra.mxu0 %v381
  %440 = vmatpush.bf16.msra.mxu0 %v377
  %441 = vmatmul.bf16.gmra.mxu0 %v418
  %v442 = vpop.f32.mrf.mxu0
  %v443 = vadd.f32 0.0, %v442
  %v444 = vpop.f32.mrf.mxu0
  %445 = vdwg.mxu0
  %446 = vmatpush.bf16.msra.mxu0 0
  %447 = vmatpush.bf16.msra.mxu0 0
  %448 = vmatpush.bf16.msra.mxu0 0
  %449 = vmatpush.bf16.msra.mxu0 %v394
  %450 = vmatpush.bf16.msra.mxu0 %v390
  %451 = vmatpush.bf16.msra.mxu0 %v386
  %452 = vmatpush.bf16.msra.mxu0 %v382
  %453 = vmatpush.bf16.msra.mxu0 %v378
  %454 = vmatmul.bf16.gmra.mxu0 %v418
  %v455 = vpop.f32.mrf.mxu0
  %v456 = vadd.f32 0.0, %v455
  %v457 = vpop.f32.mrf.mxu0
  %458 = vdwg.mxu0
  %459 = vmatpush.bf16.msra.mxu0 0
  %460 = vmatpush.bf16.msra.mxu0 0
  %461 = vmatpush.bf16.msra.mxu0 0
  %462 = vmatpush.bf16.msra.mxu0 %v395
  %463 = vmatpush.bf16.msra.mxu0 %v391
  %464 = vmatpush.bf16.msra.mxu0 %v387
  %465 = vmatpush.bf16.msra.mxu0 %v383
  %466 = vmatpush.bf16.msra.mxu0 %v379
  %467 = vmatmul.bf16.gmra.mxu0 %v418
  %v468 = vpop.f32.mrf.mxu0
  %v469 = vadd.f32 0.0, %v468
  %v470 = vpop.f32.mrf.mxu0
  %471 = vdwg.mxu0
  %p472 = scmp.eq.s32.totalorder 0, 0
  // Predicated region
  $region14: #{basic_block.4} parent=0 // pred_check
    %p473 = pneg %p472
  $region15: #{basic_block.4} parent=0 // pred_check_branch
    %475 = sbr.rel (%p473) target = $region17
  $region16: #{basic_block.4} parent=0 // pred_region
    %vm476 = vcmask 15360
    %477 = vst.msk [vmem:[%s4] sm:$0xff] %vm476, 0.0
  $region17: #{basic_block.4} parent=0 // pred_fallthru
    _
  %v478 = vld [vmem:[%s4] sm:$0xff]
  %v479 = vadd.f32 %v430, %v443
  %v480 = vadd.f32 %v479, %v456
  %v481 = vadd.f32 %v480, %v469
  %482 = vadd.xlane.f32.xlu0 %v481
  %v483 = vpop.xlane.xlu0 %482
  %v484 = vmul.f32 %v430, %v430
  %v485 = vmul.f32 %v443, %v443
  %v486 = vmul.f32 %v456, %v456
  %v487 = vmul.f32 %v469, %v469
  %v488 = vadd.f32 %v484, %v485
  %v489 = vadd.f32 %v488, %v486
  %v490 = vadd.f32 %v489, %v487
  %491 = vadd.xlane.f32.xlu0 %v490
  %v492 = vpop.xlane.xlu0 %491
  %vm493 = vcmask 7168
  %v494 = vsel %vm493, %v483, %v492
  %v495 = vadd.f32 %v478, %v494
  %vm496 = vcmask 15360
  %497 = vst.msk [vmem:[%s4] sm:$0xff] %vm496, %v495
  %498 = vst [vmem:[%s3] sm:$0xff] %v430
  %499 = vst [vmem:[%s3 + $0x8] sm:$0xff] %v443
  %s500 = scalar_lea.vmem %s3, 16
  %501 = vst [vmem:[%s500] sm:$0xff] %v456
  %502 = vst [vmem:[%s500 + $0x8] sm:$0xff] %v469
  // Predicated region
  $region18: #{basic_block.4} parent=0 // pred_check
    _
  $region19: #{basic_block.4} parent=0 // pred_check_branch
    %504 = sbr.rel (0) target = $region21
  $region20: #{basic_block.4} parent=0 // pred_region
    _
  $region21: #{basic_block.4} parent=0 // pred_fallthru
    _
  // Predicated region
  $region22: #{basic_block.4} parent=0 // pred_check
    _
  $region23: #{basic_block.4} parent=0 // pred_check_branch
    %506 = sbr.rel (0) target = $region25
  $region24: #{basic_block.4} parent=0 // pred_region
    _
  $region25: #{basic_block.4} parent=0 // pred_fallthru
    _
  // Predicated region
  $region26: #{basic_block.4} parent=0 // pred_check
    _
  $region27: #{basic_block.4} parent=0 // pred_check_branch
    %508 = sbr.rel (0) target = $region29
  $region28: #{basic_block.4} parent=0 // pred_region
    _
  $region29: #{basic_block.4} parent=0 // pred_fallthru
    _
  // Predicated region
  $region30: #{basic_block.4} parent=0 // pred_check
    _
  $region31: #{basic_block.4} parent=0 // pred_check_branch
    %510 = sbr.rel (0) target = $region33
  $region32: #{basic_block.4} parent=0 // pred_region
    _
  $region33: #{basic_block.4} parent=0 // pred_fallthru
    _

// kernel: basic_block.3
$region0: #{basic_block.3}
  #allocation0 [shape = 'u32[]', space=smem, size = 0x4, offset = 0x4, fixed_abs, tag = 'smem constant byte address 0x4 - core index']
  #allocation1 [shape = 'u32[72,128]{1,0:T(1,128)}', space=vmem, size = 0x9000, scoped, tag = 'internal scratch']
  #allocation2 [shape = 'bf16[80,512]{1,0:T(8,128)(2,1)}', space=vmem, size = 0x14000, scoped, tag = 'scratch operand']
  %s0 = inlined_call_operand.vmem [shape: f32[2,8,256], index: 0, kind: input, shape index: {}]
  %s1 = inlined_call_operand.vmem [shape: bf16[8,80], index: 1, kind: input, shape index: {}]
  %s2 = inlined_call_operand.vmem [shape: bf16[2,8,256], index: 2, kind: output, shape index: {0}]
  %s3 = inlined_call_operand.vmem [shape: f32[8,2], index: 3, kind: output, shape index: {1}]
  %4 = xla_tuple %s2, %s3
  %s5 = sld [smem:[#allocation0]]
  $region30: #{basic_block.3} parent=0
    _
  %s7 = ssub.s32 1, %s5
  %s8 = scalar_select 0, %s7, %s5
  // Predicated region
  $region2: #{basic_block.3} parent=0 // pred_check
    _
  $region3: #{basic_block.3} parent=0 // pred_check_branch
    %10 = sbr.rel (0) target = $region5
  $region4: #{basic_block.3} parent=0 // pred_region
    _
  $region5: #{basic_block.3} parent=0 // pred_fallthru
    _
  // Predicated region
  $region6: #{basic_block.3} parent=0 // pred_check
    _
  $region7: #{basic_block.3} parent=0 // pred_check_branch
    %12 = sbr.rel (0) target = $region9
  $region8: #{basic_block.3} parent=0 // pred_region
    _
  $region9: #{basic_block.3} parent=0 // pred_fallthru
    _
  %v14 = vld [vmem:[%s0] sm:$0xff]
  %v15 = vld [vmem:[%s0 + $0x8] sm:$0xff]
  %v16 = vld [vmem:[%s0 + $0x10] sm:$0xff]
  %v17 = vld [vmem:[%s0 + $0x18] sm:$0xff]
  %v18 = vlaneseq
  %v19 = vand.u32 %v18, 127
  %v20 = vadd.s32 %v19, 128
  %vm21 = vcmp.lt.s32.totalorder %v19, 0
  %v22 = vsub.s32 0, %v19
  %v23 = vsel %vm21, %v22, %v19
  %v24 = vshrl.u32 %v23, 4
  %v25 = vand.u32 %v23, 15
  %v26 = vsub.s32 0, %v25
  %v27 = vsel %vm21, %v26, %v25
  %vm28 = vcmp.lt.s32.totalorder %v20, 0
  %v29 = vsub.s32 0, %v20
  %v30 = vsel %vm28, %v29, %v20
  %v31 = vshrl.u32 %v30, 4
  %v32 = vand.u32 %v30, 15
  %v33 = vsub.s32 0, %v32
  %v34 = vsel %vm28, %v33, %v32
  %vm35 = vcmp.ne.s32.totalorder %v27, 0
  %vm36 = vcmp.ne.s32.totalorder %v34, 0
  %vm37 = vcmp.lt.s32.totalorder %v27, 0
  %vm38 = vcmp.lt.s32.totalorder %v34, 0
  %vm39 = vmand %vm37, %vm35
  %vm40 = vmand %vm38, %vm36
  %v41 = vadd.s32 %v27, 16
  %v42 = vadd.s32 %v34, 16
  %v43 = vsel %vm39, %v41, %v27
  %v44 = vsel %vm40, %v42, %v34
  %vm45 = vcmp.ge.s32.totalorder %v43, 1
  %vm46 = vcmp.ge.s32.totalorder %v44, 1
  %vm47 = vcmp.le.s32.totalorder %v43, 14
  %vm48 = vcmp.le.s32.totalorder %v44, 14
  %vm49 = vcmp.ge.s32.totalorder %v19, 16
  %vm50 = vcmp.ge.s32.totalorder %v20, 16
  %vm51 = vcmp.lt.s32.totalorder %v19, 240
  %vm52 = vcmp.lt.s32.totalorder %v20, 240
  %vm53 = vmand %vm49, %vm45
  %vm54 = vmand %vm50, %vm46
  %vm55 = vmand %vm49, %vm47
  %vm56 = vmand %vm50, %vm48
  %vm57 = vmand %vm51, %vm45
  %vm58 = vmand %vm52, %vm46
  %vm59 = vmand %vm51, %vm47
  %vm60 = vmand %vm52, %vm48
  %61 = vrot.lane.b32.xlu0 %v14, 17
  %v62 = vpop.permute.xlu0 %61
  %63 = vrot.lane.b32.xlu0 %v15, 17
  %v64 = vpop.permute.xlu0 %63
  %vm65 = vcmp.lt.s32.totalorder %v19, 17
  %v66 = vsel %vm65, %v62, %v64
  %v67 = vsel %vm65, %v64, %v62
  %v68 = vsel %vm53, 1, 0
  %v69 = vsel %vm54, 1, 0
  %vm70 = vcmp.eq.s32.totalorder %v68, 1
  %vm71 = vcmp.eq.s32.totalorder %v69, 1
  %v72 = vsel %vm70, %v67, 0.0
  %v73 = vsel %vm71, %v66, 0.0
  %74 = vrot.lane.b32.xlu0 %v14, 16
  %v75 = vpop.permute.xlu0 %74
  %76 = vrot.lane.b32.xlu0 %v15, 16
  %v77 = vpop.permute.xlu0 %76
  %vm78 = vcmp.lt.s32.totalorder %v19, 16
  %v79 = vsel %vm78, %v75, %v77
  %v80 = vsel %vm78, %v77, %v75
  %v81 = vsel %vm49, 1, 0
  %v82 = vsel %vm50, 1, 0
  %vm83 = vcmp.eq.s32.totalorder %v81, 1
  %vm84 = vcmp.eq.s32.totalorder %v82, 1
  %v85 = vsel %vm83, %v80, 0.0
  %v86 = vsel %vm84, %v79, 0.0
  %87 = vrot.lane.b32.xlu0 %v14, 15
  %v88 = vpop.permute.xlu0 %87
  %89 = vrot.lane.b32.xlu0 %v15, 15
  %v90 = vpop.permute.xlu0 %89
  %vm91 = vcmp.lt.s32.totalorder %v19, 15
  %v92 = vsel %vm91, %v88, %v90
  %v93 = vsel %vm91, %v90, %v88
  %v94 = vsel %vm55, 1, 0
  %v95 = vsel %vm56, 1, 0
  %vm96 = vcmp.eq.s32.totalorder %v94, 1
  %vm97 = vcmp.eq.s32.totalorder %v95, 1
  %v98 = vsel %vm96, %v93, 0.0
  %v99 = vsel %vm97, %v92, 0.0
  %100 = vrot.lane.b32.xlu0 %v14, 1
  %v101 = vpop.permute.xlu0 %100
  %102 = vrot.lane.b32.xlu0 %v15, 1
  %v103 = vpop.permute.xlu0 %102
  %vm104 = vcmp.lt.s32.totalorder %v19, 1
  %v105 = vsel %vm104, %v101, %v103
  %v106 = vsel %vm104, %v103, %v101
  %v107 = vsel %vm45, 1, 0
  %v108 = vsel %vm46, 1, 0
  %vm109 = vcmp.eq.s32.totalorder %v107, 1
  %vm110 = vcmp.eq.s32.totalorder %v108, 1
  %v111 = vsel %vm109, %v106, 0.0
  %v112 = vsel %vm110, %v105, 0.0
  %113 = vrot.lane.b32.xlu0 %v14, 127
  %v114 = vpop.permute.xlu0 %113
  %115 = vrot.lane.b32.xlu0 %v15, 127
  %v116 = vpop.permute.xlu0 %115
  %vm117 = vcmp.lt.s32.totalorder %v19, 127
  %v118 = vsel %vm117, %v114, %v116
  %v119 = vsel %vm117, %v116, %v114
  %v120 = vsel %vm47, 1, 0
  %v121 = vsel %vm48, 1, 0
  %vm122 = vcmp.eq.s32.totalorder %v120, 1
  %vm123 = vcmp.eq.s32.totalorder %v121, 1
  %v124 = vsel %vm122, %v118, 0.0
  %v125 = vsel %vm123, %v119, 0.0
  %126 = vrot.lane.b32.xlu0 %v14, 113
  %v127 = vpop.permute.xlu0 %126
  %128 = vrot.lane.b32.xlu0 %v15, 113
  %v129 = vpop.permute.xlu0 %128
  %vm130 = vcmp.lt.s32.totalorder %v19, 113
  %v131 = vsel %vm130, %v127, %v129
  %v132 = vsel %vm130, %v129, %v127
  %v133 = vsel %vm57, 1, 0
  %v134 = vsel %vm58, 1, 0
  %vm135 = vcmp.eq.s32.totalorder %v133, 1
  %vm136 = vcmp.eq.s32.totalorder %v134, 1
  %v137 = vsel %vm135, %v131, 0.0
  %v138 = vsel %vm136, %v132, 0.0
  %139 = vrot.lane.b32.xlu0 %v14, 112
  %v140 = vpop.permute.xlu0 %139
  %141 = vrot.lane.b32.xlu0 %v15, 112
  %v142 = vpop.permute.xlu0 %141
  %vm143 = vcmp.lt.s32.totalorder %v19, 112
  %v144 = vsel %vm143, %v140, %v142
  %v145 = vsel %vm143, %v142, %v140
  %v146 = vsel %vm51, 1, 0
  %v147 = vsel %vm52, 1, 0
  %vm148 = vcmp.eq.s32.totalorder %v146, 1
  %vm149 = vcmp.eq.s32.totalorder %v147, 1
  %v150 = vsel %vm148, %v144, 0.0
  %v151 = vsel %vm149, %v145, 0.0
  %152 = vrot.lane.b32.xlu0 %v14, 111
  %v153 = vpop.permute.xlu0 %152
  %154 = vrot.lane.b32.xlu0 %v15, 111
  %v155 = vpop.permute.xlu0 %154
  %vm156 = vcmp.lt.s32.totalorder %v19, 111
  %v157 = vsel %vm156, %v153, %v155
  %v158 = vsel %vm156, %v155, %v153
  %v159 = vsel %vm59, 1, 0
  %v160 = vsel %vm60, 1, 0
  %vm161 = vcmp.eq.s32.totalorder %v159, 1
  %vm162 = vcmp.eq.s32.totalorder %v160, 1
  %v163 = vsel %vm161, %v157, 0.0
  %v164 = vsel %vm162, %v158, 0.0
  %v165 = vpack.c.bf16 %v73, %v72
  %v166 = vpack.c.bf16 %v86, %v85
  %167 = vst [vmem:[#allocation2] sm:$0xff] %v165
  %168 = vst [vmem:[#allocation2 + $0x10] sm:$0xff] %v166
  %v169 = vpack.c.bf16 %v99, %v98
  %v170 = vpack.c.bf16 %v112, %v111
  %171 = vst [vmem:[#allocation2 + $0x20] sm:$0xff] %v169
  %172 = vst [vmem:[#allocation2 + $0x30] sm:$0xff] %v170
  %v173 = vpack.c.bf16 %v15, %v14
  %v174 = vpack.c.bf16 %v125, %v124
  %175 = vst [vmem:[#allocation2 + $0x40] sm:$0xff] %v173
  %176 = vst [vmem:[#allocation2 + $0x50] sm:$0xff] %v174
  %v177 = vpack.c.bf16 %v138, %v137
  %v178 = vpack.c.bf16 %v151, %v150
  %179 = vst [vmem:[#allocation2 + $0x60] sm:$0xff] %v177
  %180 = vst [vmem:[#allocation2 + $0x70] sm:$0xff] %v178
  %v181 = vpack.c.bf16 %v164, %v163
  %v182 = vpack.c.bf16 0.0, 0.0
  %183 = vst [vmem:[#allocation2 + $0x80] sm:$0xff] %v181
  %184 = vst [vmem:[#allocation2 + $0x90] sm:$0xff] %v182
  %185 = vrot.lane.b32.xlu0 %v16, 17
  %v186 = vpop.permute.xlu0 %185
  %187 = vrot.lane.b32.xlu0 %v17, 17
  %v188 = vpop.permute.xlu0 %187
  %v189 = vsel %vm65, %v186, %v188
  %v190 = vsel %vm65, %v188, %v186
  %v191 = vsel %vm70, %v190, 0.0
  %v192 = vsel %vm71, %v189, 0.0
  %193 = vrot.lane.b32.xlu0 %v16, 16
  %v194 = vpop.permute.xlu0 %193
  %195 = vrot.lane.b32.xlu0 %v17, 16
  %v196 = vpop.permute.xlu0 %195
  %v197 = vsel %vm78, %v194, %v196
  %v198 = vsel %vm78, %v196, %v194
  %v199 = vsel %vm83, %v198, 0.0
  %v200 = vsel %vm84, %v197, 0.0
  %201 = vrot.lane.b32.xlu0 %v16, 15
  %v202 = vpop.permute.xlu0 %201
  %203 = vrot.lane.b32.xlu0 %v17, 15
  %v204 = vpop.permute.xlu0 %203
  %v205 = vsel %vm91, %v202, %v204
  %v206 = vsel %vm91, %v204, %v202
  %v207 = vsel %vm96, %v206, 0.0
  %v208 = vsel %vm97, %v205, 0.0
  %209 = vrot.lane.b32.xlu0 %v16, 1
  %v210 = vpop.permute.xlu0 %209
  %211 = vrot.lane.b32.xlu0 %v17, 1
  %v212 = vpop.permute.xlu0 %211
  %v213 = vsel %vm104, %v210, %v212
  %v214 = vsel %vm104, %v212, %v210
  %v215 = vsel %vm109, %v214, 0.0
  %v216 = vsel %vm110, %v213, 0.0
  %217 = vrot.lane.b32.xlu0 %v16, 127
  %v218 = vpop.permute.xlu0 %217
  %219 = vrot.lane.b32.xlu0 %v17, 127
  %v220 = vpop.permute.xlu0 %219
  %v221 = vsel %vm117, %v218, %v220
  %v222 = vsel %vm117, %v220, %v218
  %v223 = vsel %vm122, %v221, 0.0
  %v224 = vsel %vm123, %v222, 0.0
  %225 = vrot.lane.b32.xlu0 %v16, 113
  %v226 = vpop.permute.xlu0 %225
  %227 = vrot.lane.b32.xlu0 %v17, 113
  %v228 = vpop.permute.xlu0 %227
  %v229 = vsel %vm130, %v226, %v228
  %v230 = vsel %vm130, %v228, %v226
  %v231 = vsel %vm135, %v229, 0.0
  %v232 = vsel %vm136, %v230, 0.0
  %233 = vrot.lane.b32.xlu0 %v16, 112
  %v234 = vpop.permute.xlu0 %233
  %235 = vrot.lane.b32.xlu0 %v17, 112
  %v236 = vpop.permute.xlu0 %235
  %v237 = vsel %vm143, %v234, %v236
  %v238 = vsel %vm143, %v236, %v234
  %v239 = vsel %vm148, %v237, 0.0
  %v240 = vsel %vm149, %v238, 0.0
  %241 = vrot.lane.b32.xlu0 %v16, 111
  %v242 = vpop.permute.xlu0 %241
  %243 = vrot.lane.b32.xlu0 %v17, 111
  %v244 = vpop.permute.xlu0 %243
  %v245 = vsel %vm156, %v242, %v244
  %v246 = vsel %vm156, %v244, %v242
  %v247 = vsel %vm161, %v245, 0.0
  %v248 = vsel %vm162, %v246, 0.0
  %v249 = vpack.c.bf16 %v192, %v191
  %v250 = vpack.c.bf16 %v200, %v199
  %251 = vst [vmem:[#allocation2 + $0x8] sm:$0xff] %v249
  %252 = vst [vmem:[#allocation2 + $0x18] sm:$0xff] %v250
  %v253 = vpack.c.bf16 %v208, %v207
  %v254 = vpack.c.bf16 %v216, %v215
  %255 = vst [vmem:[#allocation2 + $0x28] sm:$0xff] %v253
  %256 = vst [vmem:[#allocation2 + $0x38] sm:$0xff] %v254
  %v257 = vpack.c.bf16 %v17, %v16
  %v258 = vpack.c.bf16 %v224, %v223
  %259 = vst [vmem:[#allocation2 + $0x48] sm:$0xff] %v257
  %260 = vst [vmem:[#allocation2 + $0x58] sm:$0xff] %v258
  %v261 = vpack.c.bf16 %v232, %v231
  %v262 = vpack.c.bf16 %v240, %v239
  %263 = vst [vmem:[#allocation2 + $0x68] sm:$0xff] %v261
  %264 = vst [vmem:[#allocation2 + $0x78] sm:$0xff] %v262
  %v265 = vpack.c.bf16 %v248, %v247
  %266 = vst [vmem:[#allocation2 + $0x88] sm:$0xff] %v265
  %267 = vst [vmem:[#allocation2 + $0x98] sm:$0xff] %v182
  %v268 = vld [vmem:[%s1] sm:$0xf]
  %v269 = vld [vmem:[#allocation2] sm:$0xff]
  %v270 = vld [vmem:[#allocation2 + $0x8] sm:$0xff]
  %v271 = vld [vmem:[#allocation2 + $0x10] sm:$0xff]
  %v272 = vld [vmem:[#allocation2 + $0x18] sm:$0xff]
  %v273 = vld [vmem:[#allocation2 + $0x20] sm:$0xff]
  %v274 = vld [vmem:[#allocation2 + $0x28] sm:$0xff]
  %v275 = vld [vmem:[#allocation2 + $0x30] sm:$0xff]
  %v276 = vld [vmem:[#allocation2 + $0x38] sm:$0xff]
  %v277 = vld [vmem:[#allocation2 + $0x40] sm:$0xff]
  %v278 = vld [vmem:[#allocation2 + $0x48] sm:$0xff]
  %v279 = vld [vmem:[#allocation2 + $0x50] sm:$0xff]
  %v280 = vld [vmem:[#allocation2 + $0x58] sm:$0xff]
  %v281 = vld [vmem:[#allocation2 + $0x60] sm:$0xff]
  %v282 = vld [vmem:[#allocation2 + $0x68] sm:$0xff]
  %v283 = vld [vmem:[#allocation2 + $0x70] sm:$0xff]
  %v284 = vld [vmem:[#allocation2 + $0x78] sm:$0xff]
  %v285 = vld [vmem:[#allocation2 + $0x80] sm:$0xff]
  %v286 = vld [vmem:[#allocation2 + $0x88] sm:$0xff]
  %v287 = vld [vmem:[#allocation2 + $0x90] sm:$0xff]
  %v288 = vld [vmem:[#allocation2 + $0x98] sm:$0xff]
  %v309 = vunpack.c.l.b16 %v269
  %v310 = vunpack.c.h.b16 %v269
  %v311 = vunpack.c.l.b16 %v270
  %v312 = vunpack.c.h.b16 %v270
  %v313 = vunpack.c.l.b16 %v271
  %v314 = vunpack.c.h.b16 %v271
  %v315 = vunpack.c.l.b16 %v272
  %v316 = vunpack.c.h.b16 %v272
  %v317 = vunpack.c.l.b16 %v273
  %v318 = vunpack.c.h.b16 %v273
  %v319 = vunpack.c.l.b16 %v274
  %v320 = vunpack.c.h.b16 %v274
  %v321 = vunpack.c.l.b16 %v275
  %v322 = vunpack.c.h.b16 %v275
  %v323 = vunpack.c.l.b16 %v276
  %v324 = vunpack.c.h.b16 %v276
  %v325 = vunpack.c.l.b16 %v277
  %v326 = vunpack.c.h.b16 %v277
  %v327 = vunpack.c.l.b16 %v278
  %v328 = vunpack.c.h.b16 %v278
  %v329 = vunpack.c.l.b16 %v279
  %v330 = vunpack.c.h.b16 %v279
  %v331 = vunpack.c.l.b16 %v280
  %v332 = vunpack.c.h.b16 %v280
  %v333 = vunpack.c.l.b16 %v281
  %v334 = vunpack.c.h.b16 %v281
  %v335 = vunpack.c.l.b16 %v282
  %v336 = vunpack.c.h.b16 %v282
  %v337 = vunpack.c.l.b16 %v283
  %v338 = vunpack.c.h.b16 %v283
  %v339 = vunpack.c.l.b16 %v284
  %v340 = vunpack.c.h.b16 %v284
  %v341 = vunpack.c.l.b16 %v285
  %v342 = vunpack.c.h.b16 %v285
  %v343 = vunpack.c.l.b16 %v286
  %v344 = vunpack.c.h.b16 %v286
  %v345 = vunpack.c.l.b16 %v287
  %v346 = vunpack.c.h.b16 %v287
  %v347 = vunpack.c.l.b16 %v288
  %v348 = vunpack.c.h.b16 %v288
  %v349 = vpack.c.b16 %v313, %v309
  %v350 = vpack.c.b16 %v314, %v310
  %v351 = vpack.c.b16 %v315, %v311
  %v352 = vpack.c.b16 %v316, %v312
  %v353 = vpack.c.b16 %v321, %v317
  %v354 = vpack.c.b16 %v322, %v318
  %v355 = vpack.c.b16 %v323, %v319
  %v356 = vpack.c.b16 %v324, %v320
  %v357 = vpack.c.b16 %v329, %v325
  %v358 = vpack.c.b16 %v330, %v326
  %v359 = vpack.c.b16 %v331, %v327
  %v360 = vpack.c.b16 %v332, %v328
  %v361 = vpack.c.b16 %v337, %v333
  %v362 = vpack.c.b16 %v338, %v334
  %v363 = vpack.c.b16 %v339, %v335
  %v364 = vpack.c.b16 %v340, %v336
  %v365 = vpack.c.b16 %v345, %v341
  %v366 = vpack.c.b16 %v346, %v342
  %v367 = vpack.c.b16 %v347, %v343
  %v368 = vpack.c.b16 %v348, %v344
  %vm389 = vcmask 654336
  %v391 = vsel %vm389, %v268, 0
  %393 = vmatpush.bf16.msra.mxu0 0
  %394 = vmatpush.bf16.msra.mxu0 0
  %395 = vmatpush.bf16.msra.mxu0 0
  %396 = vmatpush.bf16.msra.mxu0 %v365
  %397 = vmatpush.bf16.msra.mxu0 %v361
  %398 = vmatpush.bf16.msra.mxu0 %v357
  %399 = vmatpush.bf16.msra.mxu0 %v353
  %400 = vmatpush.bf16.msra.mxu0 %v349
  %401 = vmatmul.bf16.gmra.mxu0 %v391
  %v402 = vpop.f32.mrf.mxu0
  %v403 = vadd.f32 0.0, %v402
  %v404 = vpop.f32.mrf.mxu0
  %405 = vdwg.mxu0
  %406 = vmatpush.bf16.msra.mxu0 0
  %407 = vmatpush.bf16.msra.mxu0 0
  %408 = vmatpush.bf16.msra.mxu0 0
  %409 = vmatpush.bf16.msra.mxu0 %v366
  %410 = vmatpush.bf16.msra.mxu0 %v362
  %411 = vmatpush.bf16.msra.mxu0 %v358
  %412 = vmatpush.bf16.msra.mxu0 %v354
  %413 = vmatpush.bf16.msra.mxu0 %v350
  %414 = vmatmul.bf16.gmra.mxu0 %v391
  %v415 = vpop.f32.mrf.mxu0
  %v416 = vadd.f32 0.0, %v415
  %v417 = vpop.f32.mrf.mxu0
  %418 = vdwg.mxu0
  %419 = vmatpush.bf16.msra.mxu0 0
  %420 = vmatpush.bf16.msra.mxu0 0
  %421 = vmatpush.bf16.msra.mxu0 0
  %422 = vmatpush.bf16.msra.mxu0 %v367
  %423 = vmatpush.bf16.msra.mxu0 %v363
  %424 = vmatpush.bf16.msra.mxu0 %v359
  %425 = vmatpush.bf16.msra.mxu0 %v355
  %426 = vmatpush.bf16.msra.mxu0 %v351
  %427 = vmatmul.bf16.gmra.mxu0 %v391
  %v428 = vpop.f32.mrf.mxu0
  %v429 = vadd.f32 0.0, %v428
  %v430 = vpop.f32.mrf.mxu0
  %431 = vdwg.mxu0
  %432 = vmatpush.bf16.msra.mxu0 0
  %433 = vmatpush.bf16.msra.mxu0 0
  %434 = vmatpush.bf16.msra.mxu0 0
  %435 = vmatpush.bf16.msra.mxu0 %v368
  %436 = vmatpush.bf16.msra.mxu0 %v364
  %437 = vmatpush.bf16.msra.mxu0 %v360
  %438 = vmatpush.bf16.msra.mxu0 %v356
  %439 = vmatpush.bf16.msra.mxu0 %v352
  %440 = vmatmul.bf16.gmra.mxu0 %v391
  %v441 = vpop.f32.mrf.mxu0
  %v442 = vadd.f32 0.0, %v441
  %v443 = vpop.f32.mrf.mxu0
  %444 = vdwg.mxu0
  %p445 = scmp.eq.s32.totalorder 0, 0
  // Predicated region
  $region10: #{basic_block.3} parent=0 // pred_check
    %p446 = pneg %p445
  $region11: #{basic_block.3} parent=0 // pred_check_branch
    %448 = sbr.rel (%p446) target = $region13
  $region12: #{basic_block.3} parent=0 // pred_region
    %vm449 = vcmask 15360
    %450 = vst.msk [vmem:[%s3] sm:$0xff] %vm449, 0.0
  $region13: #{basic_block.3} parent=0 // pred_fallthru
    _
  %v451 = vld [vmem:[%s3] sm:$0xff]
  %v452 = vadd.f32 %v403, %v416
  %v453 = vadd.f32 %v452, %v429
  %v454 = vadd.f32 %v453, %v442
  %455 = vadd.xlane.f32.xlu0 %v454
  %v456 = vpop.xlane.xlu0 %455
  %v457 = vmul.f32 %v403, %v403
  %v458 = vmul.f32 %v416, %v416
  %v459 = vmul.f32 %v429, %v429
  %v460 = vmul.f32 %v442, %v442
  %v461 = vadd.f32 %v457, %v458
  %v462 = vadd.f32 %v461, %v459
  %v463 = vadd.f32 %v462, %v460
  %464 = vadd.xlane.f32.xlu0 %v463
  %v465 = vpop.xlane.xlu0 %464
  %vm466 = vcmask 7168
  %v467 = vsel %vm466, %v456, %v465
  %v468 = vadd.f32 %v451, %v467
  %vm469 = vcmask 15360
  %470 = vst.msk [vmem:[%s3] sm:$0xff] %vm469, %v468
  %v471 = vpack.c.bf16 %v416, %v403
  %v472 = vpack.c.bf16 %v442, %v429
  %473 = vst [vmem:[%s2] sm:$0xff] %v471
  %s474 = scalar_lea.vmem %s2, 8
  %475 = vst [vmem:[%s474] sm:$0xff] %v472
  // Predicated region
  $region14: #{basic_block.3} parent=0 // pred_check
    _
  $region15: #{basic_block.3} parent=0 // pred_check_branch
    %477 = sbr.rel (0) target = $region17
  $region16: #{basic_block.3} parent=0 // pred_region
    _
  $region17: #{basic_block.3} parent=0 // pred_fallthru
    _
  // Predicated region
  $region18: #{basic_block.3} parent=0 // pred_check
    _
  $region19: #{basic_block.3} parent=0 // pred_check_branch
    %479 = sbr.rel (0) target = $region21
  $region20: #{basic_block.3} parent=0 // pred_region
    _
  $region21: #{basic_block.3} parent=0 // pred_fallthru
    _
  // Predicated region
  $region22: #{basic_block.3} parent=0 // pred_check
    _
  $region23: #{basic_block.3} parent=0 // pred_check_branch
    %481 = sbr.rel (0) target = $region25
  $region24: #{basic_block.3} parent=0 // pred_region
    _
  $region25: #{basic_block.3} parent=0 // pred_fallthru
    _
  // Predicated region
  $region26: #{basic_block.3} parent=0 // pred_check
    _
  $region27: #{basic_block.3} parent=0 // pred_check_branch
    %483 = sbr.rel (0) target = $region29
  $region28: #{basic_block.3} parent=0 // pred_region
    _
  $region29: #{basic_block.3} parent=0 // pred_fallthru
    _

</llo_original>
